<compile_context>
chip_gen: v5e
topology: v5e:2x2
jax: 0.10.0
libtpu: 0.0.40
codegen_flags: <defaults>
</compile_context>

<pallas_src>
import jax
import jax.numpy as jnp
import numpy as np
from jax import lax
from jax.experimental import pallas as pl
from jax.experimental.pallas import tpu as pltpu

C = 1152            # channels (groups == channels -> depthwise)
H = W = 14          # spatial size from the reference module
S = H * W           # 196 flattened spatial positions
KH = KW = 3
EPS = 1e-3

CB = 576            # channels per grid step  -> grid = (2,)
CSUB = 64           # channels per in-kernel sub-chunk (bounds vreg pressure)
NCHUNK = CB // CSUB  # 9
MARGIN = 16         # zeroed halo lanes actually read by taps (>= W + 1 = 15)
PADL = 128          # interior starts on a 128-lane boundary (aligned copy)
SP = PADL + S + MARGIN   # 340


def dwconv_bn_kernel(x_ref, w_ref, g_ref, b_ref, o_ref, xs_ref):
    # x_ref : (CB, S)   input block  (channels on sublanes, HW flat on lanes)
    # w_ref : (CB, 9)   depthwise taps per channel (row-major 3x3)
    # g_ref : (CB, 1)   gamma
    # b_ref : (CB, 1)   beta
    # o_ref : (CB, S)   output block
    # xs_ref: (CB, SP)  VMEM scratch: zero halo margins + interior copy

    # Zero ONLY the halo margins the taps can read (not the whole scratch);
    # done unconditionally every grid step (cheap, and correct if the grid is
    # core-sharded on v7x).
    xs_ref[:, PADL - MARGIN:PADL] = jnp.zeros((CB, MARGIN), jnp.float32)
    xs_ref[:, PADL + S:SP] = jnp.zeros((CB, MARGIN), jnp.float32)
    # Lane-aligned interior copy (interior starts at lane 128 -> dense stores).
    xs_ref[:, PADL:PADL + S] = x_ref[...]

    # Column-validity masks (row-crossing guards for the w-1 / w+1 taps);
    # the h-boundary is handled by the zero halo margins.
    w_idx = lax.broadcasted_iota(jnp.int32, (1, S), 1) % W
    ok_left = w_idx >= 1           # taps reading column w-1
    ok_right = w_idx <= W - 2      # taps reading column w+1
    inv_n = jnp.float32(1.0 / S)   # N*H*W = 196 samples per channel (N = 1)

    def chunk(j, carry):
        c0 = pl.multiple_of(j * CSUB, 8)
        rows = pl.ds(c0, CSUB)

        def tap(off):
            # Shifted read of the halo'd interior along the flattened axis.
            return xs_ref[rows, PADL + off:PADL + off + S]

        def wt(k):
            return w_ref[rows, k:k + 1]          # (CSUB, 1) per-channel tap

        # Depthwise 3x3 conv as 9 shifted multiply-accumulates (VPU).
        # dw == 1 taps (k = 1, 4, 7): never cross a row boundary, no mask.
        acc = tap(-W) * wt(1)
        acc = acc + tap(0) * wt(4)
        acc = acc + tap(W) * wt(7)
        # dw == 0 taps (k = 0, 3, 6): read column w-1; one mask per group.
        grp = tap(-W - 1) * wt(0)
        grp = grp + tap(-1) * wt(3)
        grp = grp + tap(W - 1) * wt(6)
        acc = acc + jnp.where(ok_left, grp, 0.0)
        # dw == 2 taps (k = 2, 5, 8): read column w+1; one mask per group.
        grp = tap(-W + 1) * wt(2)
        grp = grp + tap(1) * wt(5)
        grp = grp + tap(W + 1) * wt(8)
        acc = acc + jnp.where(ok_right, grp, 0.0)

        # BatchNorm (training mode): per-channel batch statistics, biased
        # variance, computed two-pass for numerical safety.
        mean = jnp.sum(acc, axis=1, keepdims=True) * inv_n
        cen = acc - mean
        var = jnp.sum(cen * cen, axis=1, keepdims=True) * inv_n
        scale = g_ref[rows, :] * lax.rsqrt(var + EPS)
        o_ref[rows, :] = cen * scale + b_ref[rows, :]
        return carry

    lax.fori_loop(0, NCHUNK, chunk, 0)


def dwconv_bn(x_nchw, w_oihw, gamma, beta):
    """x_nchw: (1, C, H, W); w_oihw: (C, 1, 3, 3); gamma/beta: (C,)."""
    # Free reshapes (contiguous data, no relayout / transpose / pad HBM ops).
    x2d = x_nchw.reshape(C, S)
    w2d = w_oihw.reshape(C, KH * KW)
    g2 = gamma.reshape(C, 1)
    b2 = beta.reshape(C, 1)

    y2d = pl.pallas_call(
        dwconv_bn_kernel,
        out_shape=jax.ShapeDtypeStruct((C, S), jnp.float32),
        grid_spec=pltpu.PrefetchScalarGridSpec(
            num_scalar_prefetch=0,
            grid=(C // CB,),
            in_specs=[
                pl.BlockSpec((CB, S), lambda i: (i, 0)),
                pl.BlockSpec((CB, KH * KW), lambda i: (i, 0)),
                pl.BlockSpec((CB, 1), lambda i: (i, 0)),
                pl.BlockSpec((CB, 1), lambda i: (i, 0)),
            ],
            out_specs=pl.BlockSpec((CB, S), lambda i: (i, 0)),
            scratch_shapes=[pltpu.VMEM((CB, SP), jnp.float32)],
        ),
        compiler_params=pltpu.CompilerParams(
            dimension_semantics=("parallel",)),
    )(x2d, w2d, g2, b2)

    return y2d.reshape(1, C, H, W)


def reference(x_nchw, w_oihw, gamma, beta):
    """Pure-JAX reference: depthwise conv + train-mode batchnorm."""
    y = lax.conv_general_dilated(
        x_nchw, w_oihw, window_strides=(1, 1),
        padding=((1, 1), (1, 1)), feature_group_count=C,
        dimension_numbers=("NCHW", "OIHW", "NCHW"))
    mean = jnp.mean(y, axis=(0, 2, 3), keepdims=True)
    var = jnp.mean((y - mean) ** 2, axis=(0, 2, 3), keepdims=True)
    g = gamma.reshape(1, C, 1, 1)
    b = beta.reshape(1, C, 1, 1)
    return (y - mean) * lax.rsqrt(var + EPS) * g + b


if __name__ == "__main__":
    key = jax.random.PRNGKey(0)
    kx, kw, kg, kb = jax.random.split(key, 4)

    # Deterministic synthetic parameters (shapes from the module __init__).
    x = jax.random.normal(kx, (1, C, H, W), jnp.float32)
    w = jax.random.normal(kw, (C, 1, KH, KW), jnp.float32) / 3.0
    gamma = 1.0 + 0.1 * jax.random.normal(kg, (C,), jnp.float32)
    beta = 0.1 * jax.random.normal(kb, (C,), jnp.float32)

    fn = jax.jit(dwconv_bn)
    out = jax.block_until_ready(fn(x, w, gamma, beta))

    ref = jax.block_until_ready(reference(x, w, gamma, beta))
    np.testing.assert_allclose(np.asarray(out), np.asarray(ref),
                               rtol=2e-3, atol=2e-3)
    print("KERNEL_OK")
</pallas_src>

<mosaic_0001>
module attributes {stable_mosaic.version = 11 : i64} {
  func.func @dwconv_bn_kernel(%arg0: i32, %arg1: memref<576x196xf32, #tpu.memory_space<vmem>>, %arg2: memref<576x9xf32, #tpu.memory_space<vmem>>, %arg3: memref<576x1xf32, #tpu.memory_space<vmem>>, %arg4: memref<576x1xf32, #tpu.memory_space<vmem>>, %arg5: memref<576x196xf32, #tpu.memory_space<vmem>>, %arg6: memref<576x340xf32, #tpu.memory_space<vmem>>) attributes {dimension_semantics = [#tpu.dimension_semantics<parallel>], iteration_bounds = array<i64: 2>, scalar_prefetch = 0 : i64, scratch_operands = 1 : i64, tpu.core_type = #tpu.core_type<tc>, window_params = [{transform_indices = @transform_0, window_bounds = array<i64: 576, 196>}, {transform_indices = @transform_1, window_bounds = array<i64: 576, 9>}, {transform_indices = @transform_2, window_bounds = array<i64: 576, 1>}, {transform_indices = @transform_3, window_bounds = array<i64: 576, 1>}, {transform_indices = @transform_4, window_bounds = array<i64: 576, 196>}]} {
    %cst = arith.constant 0.000000e+00 : f32
    %0 = vector.broadcast %cst : f32 to vector<576x16xf32>
    %c0 = arith.constant 0 : index
    %c112 = arith.constant 112 : index
    %1 = vector.load %arg6[%c0, %c112] : memref<576x340xf32, #tpu.memory_space<vmem>>, vector<576x16xf32>
    tpu.vector_store %arg6[%c0, %c112], %0 {strides = array<i32>} : memref<576x340xf32, #tpu.memory_space<vmem>>, vector<576x16xf32>,
    %cst_0 = arith.constant 0.000000e+00 : f32
    %2 = vector.broadcast %cst_0 : f32 to vector<576x16xf32>
    %c0_1 = arith.constant 0 : index
    %c324 = arith.constant 324 : index
    %3 = vector.load %arg6[%c0_1, %c324] : memref<576x340xf32, #tpu.memory_space<vmem>>, vector<576x16xf32>
    tpu.vector_store %arg6[%c0_1, %c324], %2 {strides = array<i32>} : memref<576x340xf32, #tpu.memory_space<vmem>>, vector<576x16xf32>,
    %c0_2 = arith.constant 0 : index
    %c0_3 = arith.constant 0 : index
    %4 = vector.load %arg1[%c0_2, %c0_3] : memref<576x196xf32, #tpu.memory_space<vmem>>, vector<576x196xf32>
    %c0_4 = arith.constant 0 : index
    %c128 = arith.constant 128 : index
    %5 = vector.load %arg6[%c0_4, %c128] : memref<576x340xf32, #tpu.memory_space<vmem>>, vector<576x196xf32>
    tpu.vector_store %arg6[%c0_4, %c128], %4 {strides = array<i32>} : memref<576x340xf32, #tpu.memory_space<vmem>>, vector<576x196xf32>,
    %6 = tpu.iota {dimensions = array<i32: 1>} : vector<1x196xi32>
    %c14_i32 = arith.constant 14 : i32
    %c0_i32 = arith.constant 0 : i32
    %7 = arith.cmpi eq, %c14_i32, %c0_i32 : i32
    %c1_i32 = arith.constant 1 : i32
    %8 = arith.select %7, %c1_i32, %c14_i32 : i32
    %9 = vector.broadcast %8 : i32 to vector<1x196xi32>
    %10 = arith.remsi %6, %9 : vector<1x196xi32>
    %c0_i32_5 = arith.constant 0 : i32
    %11 = vector.broadcast %c0_i32_5 : i32 to vector<1x196xi32>
    %12 = arith.cmpi ne, %10, %11 : vector<1x196xi32>
    %c0_i32_6 = arith.constant 0 : i32
    %13 = vector.broadcast %c0_i32_6 : i32 to vector<1x196xi32>
    %14 = arith.cmpi slt, %10, %13 : vector<1x196xi32>
    %c0_i32_7 = arith.constant 0 : i32
    %15 = arith.cmpi slt, %8, %c0_i32_7 : i32
    %16 = vector.broadcast %15 : i1 to vector<1x196xi1>
    %17 = vector.broadcast %16 : vector<1x196xi1> to vector<1x196xi1>
    %18 = arith.xori %14, %17 : vector<1x196xi1>
    %19 = arith.andi %18, %12 : vector<1x196xi1>
    %20 = vector.broadcast %8 : i32 to vector<1x196xi32>
    %21 = arith.addi %10, %20 : vector<1x196xi32>
    %22 = arith.select %19, %21, %10 : vector<1x196xi1>, vector<1x196xi32>
    %c1_i32_8 = arith.constant 1 : i32
    %23 = vector.broadcast %c1_i32_8 : i32 to vector<1x196xi32>
    %24 = arith.cmpi sge, %22, %23 : vector<1x196xi32>
    %c12_i32 = arith.constant 12 : i32
    %25 = vector.broadcast %c12_i32 : i32 to vector<1x196xi32>
    %26 = arith.cmpi sle, %22, %25 : vector<1x196xi32>
    %cst_9 = arith.constant 0.00510204071 : f32
    %c0_i32_10 = arith.constant 0 : i32
    %c9_i32 = arith.constant 9 : i32
    %27 = arith.addi %c0_i32_10, %c9_i32 : i32
    %c1_i32_11 = arith.constant 1 : i32
    scf.for %arg7 = %c0_i32_10 to %27 step %c1_i32_11  : i32 {
      %c64_i32 = arith.constant 64 : i32
      %28 = arith.muli %arg7, %c64_i32 : i32
      %29 = tpu.assume_multiple %28, 8 : i32
      %30 = arith.index_cast %29 : i32 to index
      %c114 = arith.constant 114 : index
      %31 = vector.load %arg6[%30, %c114] : memref<576x340xf32, #tpu.memory_space<vmem>>, vector<64x196xf32>
      %32 = arith.index_cast %29 : i32 to index
      %c1 = arith.constant 1 : index
      %33 = vector.load %arg2[%32, %c1] : memref<576x9xf32, #tpu.memory_space<vmem>>, vector<64x1xf32>
      %34 = vector.broadcast %33 : vector<64x1xf32> to vector<64x196xf32>
      %35 = arith.mulf %31, %34 : vector<64x196xf32>
      %36 = arith.index_cast %29 : i32 to index
      %c128_13 = arith.constant 128 : index
      %37 = vector.load %arg6[%36, %c128_13] : memref<576x340xf32, #tpu.memory_space<vmem>>, vector<64x196xf32>
      %38 = arith.index_cast %29 : i32 to index
      %c4 = arith.constant 4 : index
      %39 = vector.load %arg2[%38, %c4] : memref<576x9xf32, #tpu.memory_space<vmem>>, vector<64x1xf32>
      %40 = vector.broadcast %39 : vector<64x1xf32> to vector<64x196xf32>
      %41 = arith.mulf %37, %40 : vector<64x196xf32>
      %42 = arith.addf %35, %41 : vector<64x196xf32>
      %43 = arith.index_cast %29 : i32 to index
      %c142 = arith.constant 142 : index
      %44 = vector.load %arg6[%43, %c142] : memref<576x340xf32, #tpu.memory_space<vmem>>, vector<64x196xf32>
      %45 = arith.index_cast %29 : i32 to index
      %c7 = arith.constant 7 : index
      %46 = vector.load %arg2[%45, %c7] : memref<576x9xf32, #tpu.memory_space<vmem>>, vector<64x1xf32>
      %47 = vector.broadcast %46 : vector<64x1xf32> to vector<64x196xf32>
      %48 = arith.mulf %44, %47 : vector<64x196xf32>
      %49 = arith.addf %42, %48 : vector<64x196xf32>
      %50 = arith.index_cast %29 : i32 to index
      %c113 = arith.constant 113 : index
      %51 = vector.load %arg6[%50, %c113] : memref<576x340xf32, #tpu.memory_space<vmem>>, vector<64x196xf32>
      %52 = arith.index_cast %29 : i32 to index
      %c0_14 = arith.constant 0 : index
      %53 = vector.load %arg2[%52, %c0_14] : memref<576x9xf32, #tpu.memory_space<vmem>>, vector<64x1xf32>
      %54 = vector.broadcast %53 : vector<64x1xf32> to vector<64x196xf32>
      %55 = arith.mulf %51, %54 : vector<64x196xf32>
      %56 = arith.index_cast %29 : i32 to index
      %c127 = arith.constant 127 : index
      %57 = vector.load %arg6[%56, %c127] : memref<576x340xf32, #tpu.memory_space<vmem>>, vector<64x196xf32>
      %58 = arith.index_cast %29 : i32 to index
      %c3 = arith.constant 3 : index
      %59 = vector.load %arg2[%58, %c3] : memref<576x9xf32, #tpu.memory_space<vmem>>, vector<64x1xf32>
      %60 = vector.broadcast %59 : vector<64x1xf32> to vector<64x196xf32>
      %61 = arith.mulf %57, %60 : vector<64x196xf32>
      %62 = arith.addf %55, %61 : vector<64x196xf32>
      %63 = arith.index_cast %29 : i32 to index
      %c141 = arith.constant 141 : index
      %64 = vector.load %arg6[%63, %c141] : memref<576x340xf32, #tpu.memory_space<vmem>>, vector<64x196xf32>
      %65 = arith.index_cast %29 : i32 to index
      %c6 = arith.constant 6 : index
      %66 = vector.load %arg2[%65, %c6] : memref<576x9xf32, #tpu.memory_space<vmem>>, vector<64x1xf32>
      %67 = vector.broadcast %66 : vector<64x1xf32> to vector<64x196xf32>
      %68 = arith.mulf %64, %67 : vector<64x196xf32>
      %69 = arith.addf %62, %68 : vector<64x196xf32>
      %cst_15 = arith.constant 0.000000e+00 : f32
      %70 = vector.shape_cast %24 : vector<1x196xi1> to vector<1x196xi1>
      %71 = vector.broadcast %70 : vector<1x196xi1> to vector<64x196xi1>
      %72 = vector.broadcast %cst_15 : f32 to vector<64x196xf32>
      %73 = arith.select %71, %69, %72 : vector<64x196xi1>, vector<64x196xf32>
      %74 = arith.addf %49, %73 : vector<64x196xf32>
      %75 = arith.index_cast %29 : i32 to index
      %c115 = arith.constant 115 : index
      %76 = vector.load %arg6[%75, %c115] : memref<576x340xf32, #tpu.memory_space<vmem>>, vector<64x196xf32>
      %77 = arith.index_cast %29 : i32 to index
      %c2 = arith.constant 2 : index
      %78 = vector.load %arg2[%77, %c2] : memref<576x9xf32, #tpu.memory_space<vmem>>, vector<64x1xf32>
      %79 = vector.broadcast %78 : vector<64x1xf32> to vector<64x196xf32>
      %80 = arith.mulf %76, %79 : vector<64x196xf32>
      %81 = arith.index_cast %29 : i32 to index
      %c129 = arith.constant 129 : index
      %82 = vector.load %arg6[%81, %c129] : memref<576x340xf32, #tpu.memory_space<vmem>>, vector<64x196xf32>
      %83 = arith.index_cast %29 : i32 to index
      %c5 = arith.constant 5 : index
      %84 = vector.load %arg2[%83, %c5] : memref<576x9xf32, #tpu.memory_space<vmem>>, vector<64x1xf32>
      %85 = vector.broadcast %84 : vector<64x1xf32> to vector<64x196xf32>
      %86 = arith.mulf %82, %85 : vector<64x196xf32>
      %87 = arith.addf %80, %86 : vector<64x196xf32>
      %88 = arith.index_cast %29 : i32 to index
      %c143 = arith.constant 143 : index
      %89 = vector.load %arg6[%88, %c143] : memref<576x340xf32, #tpu.memory_space<vmem>>, vector<64x196xf32>
      %90 = arith.index_cast %29 : i32 to index
      %c8 = arith.constant 8 : index
      %91 = vector.load %arg2[%90, %c8] : memref<576x9xf32, #tpu.memory_space<vmem>>, vector<64x1xf32>
      %92 = vector.broadcast %91 : vector<64x1xf32> to vector<64x196xf32>
      %93 = arith.mulf %89, %92 : vector<64x196xf32>
      %94 = arith.addf %87, %93 : vector<64x196xf32>
      %cst_16 = arith.constant 0.000000e+00 : f32
      %95 = vector.shape_cast %26 : vector<1x196xi1> to vector<1x196xi1>
      %96 = vector.broadcast %95 : vector<1x196xi1> to vector<64x196xi1>
      %97 = vector.broadcast %cst_16 : f32 to vector<64x196xf32>
      %98 = arith.select %96, %94, %97 : vector<64x196xi1>, vector<64x196xf32>
      %99 = arith.addf %74, %98 : vector<64x196xf32>
      %cst_17 = arith.constant dense<0.000000e+00> : vector<64xf32>
      %100 = vector.multi_reduction <add>, %99, %cst_17 [1] : vector<64x196xf32> to vector<64xf32>
      %101 = vector.shape_cast %100 : vector<64xf32> to vector<64x1xf32>
      %102 = vector.broadcast %cst_9 : f32 to vector<64x1xf32>
      %103 = arith.mulf %101, %102 : vector<64x1xf32>
      %104 = vector.broadcast %103 : vector<64x1xf32> to vector<64x196xf32>
      %105 = arith.subf %99, %104 : vector<64x196xf32>
      %106 = arith.mulf %105, %105 : vector<64x196xf32>
      %cst_18 = arith.constant dense<0.000000e+00> : vector<64xf32>
      %107 = vector.multi_reduction <add>, %106, %cst_18 [1] : vector<64x196xf32> to vector<64xf32>
      %108 = vector.shape_cast %107 : vector<64xf32> to vector<64x1xf32>
      %109 = vector.broadcast %cst_9 : f32 to vector<64x1xf32>
      %110 = arith.mulf %108, %109 : vector<64x1xf32>
      %111 = arith.index_cast %29 : i32 to index
      %c0_19 = arith.constant 0 : index
      %112 = vector.load %arg3[%111, %c0_19] : memref<576x1xf32, #tpu.memory_space<vmem>>, vector<64x1xf32>
      %cst_20 = arith.constant 1.000000e-03 : f32
      %113 = vector.broadcast %cst_20 : f32 to vector<64x1xf32>
      %114 = arith.addf %110, %113 : vector<64x1xf32>
      %115 = math.rsqrt %114 : vector<64x1xf32>
      %116 = arith.mulf %112, %115 : vector<64x1xf32>
      %117 = vector.broadcast %116 : vector<64x1xf32> to vector<64x196xf32>
      %118 = arith.mulf %105, %117 : vector<64x196xf32>
      %119 = arith.index_cast %29 : i32 to index
      %c0_21 = arith.constant 0 : index
      %120 = vector.load %arg4[%119, %c0_21] : memref<576x1xf32, #tpu.memory_space<vmem>>, vector<64x1xf32>
      %121 = vector.broadcast %120 : vector<64x1xf32> to vector<64x196xf32>
      %122 = arith.addf %118, %121 : vector<64x196xf32>
      %123 = arith.index_cast %29 : i32 to index
      %c0_22 = arith.constant 0 : index
      %124 = vector.load %arg5[%123, %c0_22] : memref<576x196xf32, #tpu.memory_space<vmem>>, vector<64x196xf32>
      tpu.vector_store %arg5[%123, %c0_22], %122 {strides = array<i32>} : memref<576x196xf32, #tpu.memory_space<vmem>>, vector<64x196xf32>,
    }
    %c9_i32_12 = arith.constant 9 : i32
    return
  }
  func.func @transform_0(%arg0: i32) -> (i32, i32) {
    %c0_i32 = arith.constant 0 : i32
    %c0_i32_0 = arith.constant 0 : i32
    return %arg0, %c0_i32 : i32, i32
  }
  func.func @transform_1(%arg0: i32) -> (i32, i32) {
    %c0_i32 = arith.constant 0 : i32
    %c0_i32_0 = arith.constant 0 : i32
    return %arg0, %c0_i32 : i32, i32
  }
  func.func @transform_2(%arg0: i32) -> (i32, i32) {
    %c0_i32 = arith.constant 0 : i32
    %c0_i32_0 = arith.constant 0 : i32
    return %arg0, %c0_i32 : i32, i32
  }
  func.func @transform_3(%arg0: i32) -> (i32, i32) {
    %c0_i32 = arith.constant 0 : i32
    %c0_i32_0 = arith.constant 0 : i32
    return %arg0, %c0_i32 : i32, i32
  }
  func.func @transform_4(%arg0: i32) -> (i32, i32) {
    %c0_i32 = arith.constant 0 : i32
    %c0_i32_0 = arith.constant 0 : i32
    return %arg0, %c0_i32 : i32, i32
  }
}

</mosaic_0001>

<llo_original>
// kernel: dwconv_bn.1
$region0: #{dwconv_bn.1}
  #allocation0 [shape = 'u32[]', space=smem, size = 0x4, offset = 0x4, fixed_abs, tag = 'smem constant byte address 0x4 - core index']
  #allocation1 [shape = 'u32[72,128]{1,0:T(1,128)}', space=vmem, size = 0x9000, scoped, tag = 'internal scratch']
  #allocation2 [shape = 'f32[576,340]{1,0:T(8,128)}', space=vmem, size = 0xd8000, scoped, tag = 'scratch operand']
  %s0 = inlined_call_operand.vmem [shape: f32[1152,196], index: 0, kind: input, shape index: {}]
  %s1 = inlined_call_operand.vmem [shape: f32[1152,9], index: 1, kind: input, shape index: {}]
  %s2 = inlined_call_operand.vmem [shape: f32[1152,1], index: 2, kind: input, shape index: {}]
  %s3 = inlined_call_operand.vmem [shape: f32[1152,1], index: 3, kind: input, shape index: {}]
  %s4 = inlined_call_operand.vmem [shape: f32[1152,196], index: 4, kind: output, shape index: {}]
  %s5 = sld [smem:[#allocation0]]
  $region56: #{dwconv_bn.1} parent=0
    _
  %s7 = ssub.s32 1, %s5
  %s8 = scalar_select 0, %s7, %s5
  loop: start=0, step=1, limit=4
  $region2: #{dwconv_bn.1} parent=0 // loop_pre_header
    _
  $region3: #{dwconv_bn.1} parent=0 // loop_header
    %s10 = sphi 0, %s14
    %p11 = scmp.ge.s32.totalorder %s10, 4
    %s20 = sphi 0, %s22
    %s23 = sphi 0, %s20
    %s24 = sphi 0, %s23
    %s40 = sphi 0, %s24
    %s46 = sphi 0, %s48
    %s49 = sphi 0, %s46
    %s50 = sphi 0, %s49
    %s66 = sphi 0, %s50
    %s72 = sphi 0, %s74
    %s75 = sphi 0, %s72
    %s76 = sphi 0, %s75
    %s92 = sphi 0, %s76
    %s98 = sphi 0, %s100
    %s101 = sphi 0, %s98
    %s102 = sphi 0, %s101
    %s118 = sphi 0, %s102
    %s124 = sphi 0, %s126
    %s127 = sphi 0, %s124
    %s128 = sphi 0, %s127
    %s144 = sphi 0, %s128
  $region4: #{dwconv_bn.1} parent=0 // loop_header_branch
    %13 = sbr.rel (%p11) target = $region8
  $region5: #{dwconv_bn.1} parent=0 // loop_body
    %s15 = ssub.s32 %s10, 1
    %s16 = ssub.s32 %s10, 2
    %s17 = sadd.s32 %s10, 1
    %s18 = ssub.s32 %s10, %s17
    %p19 = scmp.eq.s32.totalorder %s18, 0
    %s21 = sadd.s32 %s20, 1
    %s22 = scalar_select %p19, %s20, %s21
    %p25 = pneg %p19
    %p26 = scmp.eq.s32.totalorder %s10, 1
    %p27 = por %p25, %p26
    %p28 = scmp.ne.s32.totalorder %s20, %s23
    %p29 = scmp.eq.s32.totalorder %s10, 0
    %p30 = por %p28, %p29
    %p31 = scmp.ne.s32.totalorder %s20, %s23
    %p32 = scmp.eq.s32.totalorder %s15, 1
    %p33 = por %p31, %p32
    %p34 = scmp.ne.s32.totalorder %s23, %s24
    %p35 = scmp.eq.s32.totalorder %s15, 0
    %p36 = por %p34, %p35
    %p37 = scmp.ne.s32.totalorder %s23, %s24
    %p38 = scmp.eq.s32.totalorder %s16, 1
    %p39 = por %p37, %p38
    %p41 = scmp.ne.s32.totalorder %s24, %s40
    %p42 = scmp.eq.s32.totalorder %s16, 0
    %p43 = por %p41, %p42
    %s44 = ssub.s32 %s10, %s17
    %p45 = scmp.eq.s32.totalorder %s44, 0
    %s47 = sadd.s32 %s46, 1
    %s48 = scalar_select %p45, %s46, %s47
    %p51 = pneg %p45
    %p52 = scmp.eq.s32.totalorder %s10, 1
    %p53 = por %p51, %p52
    %p54 = scmp.ne.s32.totalorder %s46, %s49
    %p55 = scmp.eq.s32.totalorder %s10, 0
    %p56 = por %p54, %p55
    %p57 = scmp.ne.s32.totalorder %s46, %s49
    %p58 = scmp.eq.s32.totalorder %s15, 1
    %p59 = por %p57, %p58
    %p60 = scmp.ne.s32.totalorder %s49, %s50
    %p61 = scmp.eq.s32.totalorder %s15, 0
    %p62 = por %p60, %p61
    %p63 = scmp.ne.s32.totalorder %s49, %s50
    %p64 = scmp.eq.s32.totalorder %s16, 1
    %p65 = por %p63, %p64
    %p67 = scmp.ne.s32.totalorder %s50, %s66
    %p68 = scmp.eq.s32.totalorder %s16, 0
    %p69 = por %p67, %p68
    %s70 = ssub.s32 %s10, %s17
    %p71 = scmp.eq.s32.totalorder %s70, 0
    %s73 = sadd.s32 %s72, 1
    %s74 = scalar_select %p71, %s72, %s73
    %p77 = pneg %p71
    %p78 = scmp.eq.s32.totalorder %s10, 1
    %p79 = por %p77, %p78
    %p80 = scmp.ne.s32.totalorder %s72, %s75
    %p81 = scmp.eq.s32.totalorder %s10, 0
    %p82 = por %p80, %p81
    %p83 = scmp.ne.s32.totalorder %s72, %s75
    %p84 = scmp.eq.s32.totalorder %s15, 1
    %p85 = por %p83, %p84
    %p86 = scmp.ne.s32.totalorder %s75, %s76
    %p87 = scmp.eq.s32.totalorder %s15, 0
    %p88 = por %p86, %p87
    %p89 = scmp.ne.s32.totalorder %s75, %s76
    %p90 = scmp.eq.s32.totalorder %s16, 1
    %p91 = por %p89, %p90
    %p93 = scmp.ne.s32.totalorder %s76, %s92
    %p94 = scmp.eq.s32.totalorder %s16, 0
    %p95 = por %p93, %p94
    %s96 = ssub.s32 %s10, %s17
    %p97 = scmp.eq.s32.totalorder %s96, 0
    %s99 = sadd.s32 %s98, 1
    %s100 = scalar_select %p97, %s98, %s99
    %p103 = pneg %p97
    %p104 = scmp.eq.s32.totalorder %s10, 1
    %p105 = por %p103, %p104
    %p106 = scmp.ne.s32.totalorder %s98, %s101
    %p107 = scmp.eq.s32.totalorder %s10, 0
    %p108 = por %p106, %p107
    %p109 = scmp.ne.s32.totalorder %s98, %s101
    %p110 = scmp.eq.s32.totalorder %s15, 1
    %p111 = por %p109, %p110
    %p112 = scmp.ne.s32.totalorder %s101, %s102
    %p113 = scmp.eq.s32.totalorder %s15, 0
    %p114 = por %p112, %p113
    %p115 = scmp.ne.s32.totalorder %s101, %s102
    %p116 = scmp.eq.s32.totalorder %s16, 1
    %p117 = por %p115, %p116
    %p119 = scmp.ne.s32.totalorder %s102, %s118
    %p120 = scmp.eq.s32.totalorder %s16, 0
    %p121 = por %p119, %p120
    %s122 = ssub.s32 %s10, %s17
    %p123 = scmp.eq.s32.totalorder %s122, 0
    %s125 = sadd.s32 %s124, 1
    %s126 = scalar_select %p123, %s124, %s125
    %p129 = pneg %p123
    %p130 = scmp.eq.s32.totalorder %s10, 1
    %p131 = por %p129, %p130
    %p132 = scmp.ne.s32.totalorder %s124, %s127
    %p133 = scmp.eq.s32.totalorder %s10, 0
    %p134 = por %p132, %p133
    %p135 = scmp.ne.s32.totalorder %s124, %s127
    %p136 = scmp.eq.s32.totalorder %s15, 1
    %p137 = por %p135, %p136
    %p138 = scmp.ne.s32.totalorder %s127, %s128
    %p139 = scmp.eq.s32.totalorder %s15, 0
    %p140 = por %p138, %p139
    %p141 = scmp.ne.s32.totalorder %s127, %s128
    %p142 = scmp.eq.s32.totalorder %s16, 1
    %p143 = por %p141, %p142
    %p145 = scmp.ne.s32.totalorder %s128, %s144
    %p146 = scmp.eq.s32.totalorder %s16, 0
    %p147 = por %p145, %p146
    %p148 = scmp.le.s32.totalorder 1, %s10
    %p149 = scmp.lt.s32.totalorder %s10, 3
    %p150 = pnand %p148, %p149
    %p151 = pneg %p150
    // Predicated region
    $region9: #{dwconv_bn.1} parent=5 // pred_check
      _
    $region10: #{dwconv_bn.1} parent=5 // pred_check_branch
      %153 = sbr.rel (%p150) target = $region12
    $region11: #{dwconv_bn.1} parent=5 // pred_region
      %s154 = ssub.s32 %s10, 1
    $region12: #{dwconv_bn.1} parent=5 // pred_fallthru
      _
    %p155 = scmp.lt.s32.totalorder %s10, 2
    // Predicated region
    $region13: #{dwconv_bn.1} parent=5 // pred_check
      %p156 = pneg %p155
    $region14: #{dwconv_bn.1} parent=5 // pred_check_branch
      %158 = sbr.rel (%p156) target = $region16
    $region15: #{dwconv_bn.1} parent=5 // pred_region
      // Predicated region
      $region17: #{dwconv_bn.1} parent=15 // pred_check
        %p159 = pneg %p30
      $region18: #{dwconv_bn.1} parent=15 // pred_check_branch
        %161 = sbr.rel (%p159) target = $region20
      $region19: #{dwconv_bn.1} parent=15 // pred_region
        %s162 = smul.u32 72, %s10
        %p163 = scmp.lt.s32.totalorder %s162, 143
        %s164 = scalar_select %p163, %s162, 143
        %s165 = smul.addr %s164, 2
        %s166 = smul.addr %s165, 8
        %s167 = scalar_lea.vmem %s0, %s166
        %s168 = smul.u32 72, %s10
      $region20: #{dwconv_bn.1} parent=15 // pred_fallthru
        _
      // Predicated region
      $region21: #{dwconv_bn.1} parent=15 // pred_check
        %p169 = pneg %p56
      $region22: #{dwconv_bn.1} parent=15 // pred_check_branch
        %171 = sbr.rel (%p169) target = $region24
      $region23: #{dwconv_bn.1} parent=15 // pred_region
        %s172 = smul.u32 72, %s10
        %p173 = scmp.lt.s32.totalorder %s172, 143
        %s174 = scalar_select %p173, %s172, 143
        %s175 = smul.addr %s174, 8
        %s176 = scalar_lea.vmem %s1, %s175
        %s177 = smul.u32 72, %s10
      $region24: #{dwconv_bn.1} parent=15 // pred_fallthru
        _
      // Predicated region
      $region25: #{dwconv_bn.1} parent=15 // pred_check
        %p178 = pneg %p82
      $region26: #{dwconv_bn.1} parent=15 // pred_check_branch
        %180 = sbr.rel (%p178) target = $region28
      $region27: #{dwconv_bn.1} parent=15 // pred_region
        %s181 = smul.u32 72, %s10
        %p182 = scmp.lt.s32.totalorder %s181, 143
        %s183 = scalar_select %p182, %s181, 143
        %s184 = smul.addr %s183, 8
        %s185 = scalar_lea.vmem %s2, %s184
        %s186 = smul.u32 72, %s10
      $region28: #{dwconv_bn.1} parent=15 // pred_fallthru
        _
      // Predicated region
      $region29: #{dwconv_bn.1} parent=15 // pred_check
        %p187 = pneg %p108
      $region30: #{dwconv_bn.1} parent=15 // pred_check_branch
        %189 = sbr.rel (%p187) target = $region32
      $region31: #{dwconv_bn.1} parent=15 // pred_region
        %s190 = smul.u32 72, %s10
        %p191 = scmp.lt.s32.totalorder %s190, 143
        %s192 = scalar_select %p191, %s190, 143
        %s193 = smul.addr %s192, 8
        %s194 = scalar_lea.vmem %s3, %s193
        %s195 = smul.u32 72, %s10
      $region32: #{dwconv_bn.1} parent=15 // pred_fallthru
        _
    $region16: #{dwconv_bn.1} parent=5 // pred_fallthru
      _
    %p196 = scmp.le.s32.totalorder 1, %s10
    %p197 = scmp.lt.s32.totalorder %s10, 3
    %p198 = pnand %p196, %p197
    %p199 = pneg %p198
    // Predicated region
    $region33: #{dwconv_bn.1} parent=5 // pred_check
      _
    $region34: #{dwconv_bn.1} parent=5 // pred_check_branch
      %201 = sbr.rel (%p198) target = $region36
    $region35: #{dwconv_bn.1} parent=5 // pred_region
      %s202 = ssub.s32 %s10, 1
      %s203 = smul.u32 72, %s15
      %p204 = scmp.lt.s32.totalorder %s203, 143
      %s205 = scalar_select %p204, %s203, 143
      %s206 = smul.addr %s205, 2
      %s207 = smul.addr %s206, 8
      %s208 = scalar_lea.vmem %s0, %s207
      %p209 = pneg %p36
      %p210 = pneg %p33
      %s211 = smul.u32 72, %s15
      %p212 = scmp.lt.s32.totalorder %s211, 143
      %s213 = scalar_select %p212, %s211, 143
      %s214 = smul.addr %s213, 8
      %s215 = scalar_lea.vmem %s1, %s214
      %p216 = pneg %p62
      %p217 = pneg %p59
      %s218 = smul.u32 72, %s15
      %p219 = scmp.lt.s32.totalorder %s218, 143
      %s220 = scalar_select %p219, %s218, 143
      %s221 = smul.addr %s220, 8
      %s222 = scalar_lea.vmem %s2, %s221
      %p223 = pneg %p88
      %p224 = pneg %p85
      %s225 = smul.u32 72, %s15
      %p226 = scmp.lt.s32.totalorder %s225, 143
      %s227 = scalar_select %p226, %s225, 143
      %s228 = smul.addr %s227, 8
      %s229 = scalar_lea.vmem %s3, %s228
      %p230 = pneg %p114
      %p231 = pneg %p111
      %p232 = pneg %p140
      %p233 = pneg %p137
      %s234 = smul.u32 72, %s15
      %p235 = scmp.lt.s32.totalorder %s234, 143
      %s236 = scalar_select %p235, %s234, 143
      %s237 = smul.addr %s236, 2
      %s238 = smul.addr %s237, 8
      %s239 = scalar_lea.vmem %s4, %s238
      %s240 = smul.u32 72, %s15
      %p241 = scmp.lt.s32.totalorder %s240, 143
      %s242 = scalar_select %p241, %s240, 143
      %s243 = smul.addr %s242, 2
      %s244 = smul.addr %s243, 8
      %s245 = scalar_lea.vmem %s0, %s244
      %s246 = smul.u32 72, %s15
      %s247 = smul.u32 72, %s15
      %p248 = scmp.lt.s32.totalorder %s247, 143
      %s249 = scalar_select %p248, %s247, 143
      %s250 = smul.addr %s249, 8
      %s251 = scalar_lea.vmem %s1, %s250
      %s252 = smul.u32 72, %s15
      %s253 = smul.u32 72, %s15
      %p254 = scmp.lt.s32.totalorder %s253, 143
      %s255 = scalar_select %p254, %s253, 143
      %s256 = smul.addr %s255, 8
      %s257 = scalar_lea.vmem %s2, %s256
      %s258 = smul.u32 72, %s15
      %s259 = smul.u32 72, %s15
      %p260 = scmp.lt.s32.totalorder %s259, 143
      %s261 = scalar_select %p260, %s259, 143
      %s262 = smul.addr %s261, 8
      %s263 = scalar_lea.vmem %s3, %s262
      %s264 = smul.u32 72, %s15
      %s265 = smul.u32 72, %s15
      %p266 = scmp.lt.s32.totalorder %s265, 143
      %s267 = scalar_select %p266, %s265, 143
      %s268 = smul.addr %s267, 2
      %s269 = smul.addr %s268, 8
      %s270 = scalar_lea.vmem %s4, %s269
      %s271 = smul.u32 72, %s15
      %vm272 = vcmask 1048448
      %273 = vst.msk [vmem:[#allocation2] sm:$0xff] %vm272, 0.0
      %274 = vst.msk [vmem:[#allocation2 + $0x18] sm:$0xff] %vm272, 0.0
      %275 = vst.msk [vmem:[#allocation2 + $0x30] sm:$0xff] %vm272, 0.0
      %276 = vst.msk [vmem:[#allocation2 + $0x48] sm:$0xff] %vm272, 0.0
      %277 = vst.msk [vmem:[#allocation2 + $0x60] sm:$0xff] %vm272, 0.0
      %278 = vst.msk [vmem:[#allocation2 + $0x78] sm:$0xff] %vm272, 0.0
      %279 = vst.msk [vmem:[#allocation2 + $0x90] sm:$0xff] %vm272, 0.0
      %280 = vst.msk [vmem:[#allocation2 + $0xa8] sm:$0xff] %vm272, 0.0
      %281 = vst.msk [vmem:[#allocation2 + $0xc0] sm:$0xff] %vm272, 0.0
      %282 = vst.msk [vmem:[#allocation2 + $0xd8] sm:$0xff] %vm272, 0.0
      %283 = vst.msk [vmem:[#allocation2 + $0xf0] sm:$0xff] %vm272, 0.0
      %284 = vst.msk [vmem:[#allocation2 + $0x108] sm:$0xff] %vm272, 0.0
      %285 = vst.msk [vmem:[#allocation2 + $0x120] sm:$0xff] %vm272, 0.0
      %286 = vst.msk [vmem:[#allocation2 + $0x138] sm:$0xff] %vm272, 0.0
      %287 = vst.msk [vmem:[#allocation2 + $0x150] sm:$0xff] %vm272, 0.0
      %288 = vst.msk [vmem:[#allocation2 + $0x168] sm:$0xff] %vm272, 0.0
      %289 = vst.msk [vmem:[#allocation2 + $0x180] sm:$0xff] %vm272, 0.0
      %290 = vst.msk [vmem:[#allocation2 + $0x198] sm:$0xff] %vm272, 0.0
      %291 = vst.msk [vmem:[#allocation2 + $0x1b0] sm:$0xff] %vm272, 0.0
      %292 = vst.msk [vmem:[#allocation2 + $0x1c8] sm:$0xff] %vm272, 0.0
      %293 = vst.msk [vmem:[#allocation2 + $0x1e0] sm:$0xff] %vm272, 0.0
      %294 = vst.msk [vmem:[#allocation2 + $0x1f8] sm:$0xff] %vm272, 0.0
      %295 = vst.msk [vmem:[#allocation2 + $0x210] sm:$0xff] %vm272, 0.0
      %296 = vst.msk [vmem:[#allocation2 + $0x228] sm:$0xff] %vm272, 0.0
      %297 = vst.msk [vmem:[#allocation2 + $0x240] sm:$0xff] %vm272, 0.0
      %298 = vst.msk [vmem:[#allocation2 + $0x258] sm:$0xff] %vm272, 0.0
      %299 = vst.msk [vmem:[#allocation2 + $0x270] sm:$0xff] %vm272, 0.0
      %300 = vst.msk [vmem:[#allocation2 + $0x288] sm:$0xff] %vm272, 0.0
      %301 = vst.msk [vmem:[#allocation2 + $0x2a0] sm:$0xff] %vm272, 0.0
      %302 = vst.msk [vmem:[#allocation2 + $0x2b8] sm:$0xff] %vm272, 0.0
      %303 = vst.msk [vmem:[#allocation2 + $0x2d0] sm:$0xff] %vm272, 0.0
      %304 = vst.msk [vmem:[#allocation2 + $0x2e8] sm:$0xff] %vm272, 0.0
      %305 = vst.msk [vmem:[#allocation2 + $0x300] sm:$0xff] %vm272, 0.0
      %306 = vst.msk [vmem:[#allocation2 + $0x318] sm:$0xff] %vm272, 0.0
      %307 = vst.msk [vmem:[#allocation2 + $0x330] sm:$0xff] %vm272, 0.0
      %308 = vst.msk [vmem:[#allocation2 + $0x348] sm:$0xff] %vm272, 0.0
      %309 = vst.msk [vmem:[#allocation2 + $0x360] sm:$0xff] %vm272, 0.0
      %310 = vst.msk [vmem:[#allocation2 + $0x378] sm:$0xff] %vm272, 0.0
      %311 = vst.msk [vmem:[#allocation2 + $0x390] sm:$0xff] %vm272, 0.0
      %312 = vst.msk [vmem:[#allocation2 + $0x3a8] sm:$0xff] %vm272, 0.0
      %313 = vst.msk [vmem:[#allocation2 + $0x3c0] sm:$0xff] %vm272, 0.0
      %314 = vst.msk [vmem:[#allocation2 + $0x3d8] sm:$0xff] %vm272, 0.0
      %315 = vst.msk [vmem:[#allocation2 + $0x3f0] sm:$0xff] %vm272, 0.0
      %316 = vst.msk [vmem:[#allocation2 + $0x408] sm:$0xff] %vm272, 0.0
      %317 = vst.msk [vmem:[#allocation2 + $0x420] sm:$0xff] %vm272, 0.0
      %318 = vst.msk [vmem:[#allocation2 + $0x438] sm:$0xff] %vm272, 0.0
      %319 = vst.msk [vmem:[#allocation2 + $0x450] sm:$0xff] %vm272, 0.0
      %320 = vst.msk [vmem:[#allocation2 + $0x468] sm:$0xff] %vm272, 0.0
      %321 = vst.msk [vmem:[#allocation2 + $0x480] sm:$0xff] %vm272, 0.0
      %322 = vst.msk [vmem:[#allocation2 + $0x498] sm:$0xff] %vm272, 0.0
      %323 = vst.msk [vmem:[#allocation2 + $0x4b0] sm:$0xff] %vm272, 0.0
      %324 = vst.msk [vmem:[#allocation2 + $0x4c8] sm:$0xff] %vm272, 0.0
      %325 = vst.msk [vmem:[#allocation2 + $0x4e0] sm:$0xff] %vm272, 0.0
      %326 = vst.msk [vmem:[#allocation2 + $0x4f8] sm:$0xff] %vm272, 0.0
      %327 = vst.msk [vmem:[#allocation2 + $0x510] sm:$0xff] %vm272, 0.0
      %328 = vst.msk [vmem:[#allocation2 + $0x528] sm:$0xff] %vm272, 0.0
      %329 = vst.msk [vmem:[#allocation2 + $0x540] sm:$0xff] %vm272, 0.0
      %330 = vst.msk [vmem:[#allocation2 + $0x558] sm:$0xff] %vm272, 0.0
      %331 = vst.msk [vmem:[#allocation2 + $0x570] sm:$0xff] %vm272, 0.0
      %332 = vst.msk [vmem:[#allocation2 + $0x588] sm:$0xff] %vm272, 0.0
      %333 = vst.msk [vmem:[#allocation2 + $0x5a0] sm:$0xff] %vm272, 0.0
      %334 = vst.msk [vmem:[#allocation2 + $0x5b8] sm:$0xff] %vm272, 0.0
      %335 = vst.msk [vmem:[#allocation2 + $0x5d0] sm:$0xff] %vm272, 0.0
      %336 = vst.msk [vmem:[#allocation2 + $0x5e8] sm:$0xff] %vm272, 0.0
      %337 = vst.msk [vmem:[#allocation2 + $0x600] sm:$0xff] %vm272, 0.0
      %338 = vst.msk [vmem:[#allocation2 + $0x618] sm:$0xff] %vm272, 0.0
      %339 = vst.msk [vmem:[#allocation2 + $0x630] sm:$0xff] %vm272, 0.0
      %340 = vst.msk [vmem:[#allocation2 + $0x648] sm:$0xff] %vm272, 0.0
      %341 = vst.msk [vmem:[#allocation2 + $0x660] sm:$0xff] %vm272, 0.0
      %342 = vst.msk [vmem:[#allocation2 + $0x678] sm:$0xff] %vm272, 0.0
      %343 = vst.msk [vmem:[#allocation2 + $0x690] sm:$0xff] %vm272, 0.0
      %344 = vst.msk [vmem:[#allocation2 + $0x6a8] sm:$0xff] %vm272, 0.0
      %vm345 = vcmask 687648
      %346 = vst.msk [vmem:[#allocation2 + $0x10] sm:$0xff] %vm345, 0.0
      %347 = vst.msk [vmem:[#allocation2 + $0x28] sm:$0xff] %vm345, 0.0
      %348 = vst.msk [vmem:[#allocation2 + $0x40] sm:$0xff] %vm345, 0.0
      %349 = vst.msk [vmem:[#allocation2 + $0x58] sm:$0xff] %vm345, 0.0
      %350 = vst.msk [vmem:[#allocation2 + $0x70] sm:$0xff] %vm345, 0.0
      %351 = vst.msk [vmem:[#allocation2 + $0x88] sm:$0xff] %vm345, 0.0
      %352 = vst.msk [vmem:[#allocation2 + $0xa0] sm:$0xff] %vm345, 0.0
      %353 = vst.msk [vmem:[#allocation2 + $0xb8] sm:$0xff] %vm345, 0.0
      %354 = vst.msk [vmem:[#allocation2 + $0xd0] sm:$0xff] %vm345, 0.0
      %355 = vst.msk [vmem:[#allocation2 + $0xe8] sm:$0xff] %vm345, 0.0
      %356 = vst.msk [vmem:[#allocation2 + $0x100] sm:$0xff] %vm345, 0.0
      %357 = vst.msk [vmem:[#allocation2 + $0x118] sm:$0xff] %vm345, 0.0
      %358 = vst.msk [vmem:[#allocation2 + $0x130] sm:$0xff] %vm345, 0.0
      %359 = vst.msk [vmem:[#allocation2 + $0x148] sm:$0xff] %vm345, 0.0
      %360 = vst.msk [vmem:[#allocation2 + $0x160] sm:$0xff] %vm345, 0.0
      %361 = vst.msk [vmem:[#allocation2 + $0x178] sm:$0xff] %vm345, 0.0
      %362 = vst.msk [vmem:[#allocation2 + $0x190] sm:$0xff] %vm345, 0.0
      %363 = vst.msk [vmem:[#allocation2 + $0x1a8] sm:$0xff] %vm345, 0.0
      %364 = vst.msk [vmem:[#allocation2 + $0x1c0] sm:$0xff] %vm345, 0.0
      %365 = vst.msk [vmem:[#allocation2 + $0x1d8] sm:$0xff] %vm345, 0.0
      %366 = vst.msk [vmem:[#allocation2 + $0x1f0] sm:$0xff] %vm345, 0.0
      %367 = vst.msk [vmem:[#allocation2 + $0x208] sm:$0xff] %vm345, 0.0
      %368 = vst.msk [vmem:[#allocation2 + $0x220] sm:$0xff] %vm345, 0.0
      %369 = vst.msk [vmem:[#allocation2 + $0x238] sm:$0xff] %vm345, 0.0
      %370 = vst.msk [vmem:[#allocation2 + $0x250] sm:$0xff] %vm345, 0.0
      %371 = vst.msk [vmem:[#allocation2 + $0x268] sm:$0xff] %vm345, 0.0
      %372 = vst.msk [vmem:[#allocation2 + $0x280] sm:$0xff] %vm345, 0.0
      %373 = vst.msk [vmem:[#allocation2 + $0x298] sm:$0xff] %vm345, 0.0
      %374 = vst.msk [vmem:[#allocation2 + $0x2b0] sm:$0xff] %vm345, 0.0
      %375 = vst.msk [vmem:[#allocation2 + $0x2c8] sm:$0xff] %vm345, 0.0
      %376 = vst.msk [vmem:[#allocation2 + $0x2e0] sm:$0xff] %vm345, 0.0
      %377 = vst.msk [vmem:[#allocation2 + $0x2f8] sm:$0xff] %vm345, 0.0
      %378 = vst.msk [vmem:[#allocation2 + $0x310] sm:$0xff] %vm345, 0.0
      %379 = vst.msk [vmem:[#allocation2 + $0x328] sm:$0xff] %vm345, 0.0
      %380 = vst.msk [vmem:[#allocation2 + $0x340] sm:$0xff] %vm345, 0.0
      %381 = vst.msk [vmem:[#allocation2 + $0x358] sm:$0xff] %vm345, 0.0
      %382 = vst.msk [vmem:[#allocation2 + $0x370] sm:$0xff] %vm345, 0.0
      %383 = vst.msk [vmem:[#allocation2 + $0x388] sm:$0xff] %vm345, 0.0
      %384 = vst.msk [vmem:[#allocation2 + $0x3a0] sm:$0xff] %vm345, 0.0
      %385 = vst.msk [vmem:[#allocation2 + $0x3b8] sm:$0xff] %vm345, 0.0
      %386 = vst.msk [vmem:[#allocation2 + $0x3d0] sm:$0xff] %vm345, 0.0
      %387 = vst.msk [vmem:[#allocation2 + $0x3e8] sm:$0xff] %vm345, 0.0
      %388 = vst.msk [vmem:[#allocation2 + $0x400] sm:$0xff] %vm345, 0.0
      %389 = vst.msk [vmem:[#allocation2 + $0x418] sm:$0xff] %vm345, 0.0
      %390 = vst.msk [vmem:[#allocation2 + $0x430] sm:$0xff] %vm345, 0.0
      %391 = vst.msk [vmem:[#allocation2 + $0x448] sm:$0xff] %vm345, 0.0
      %392 = vst.msk [vmem:[#allocation2 + $0x460] sm:$0xff] %vm345, 0.0
      %393 = vst.msk [vmem:[#allocation2 + $0x478] sm:$0xff] %vm345, 0.0
      %394 = vst.msk [vmem:[#allocation2 + $0x490] sm:$0xff] %vm345, 0.0
      %395 = vst.msk [vmem:[#allocation2 + $0x4a8] sm:$0xff] %vm345, 0.0
      %396 = vst.msk [vmem:[#allocation2 + $0x4c0] sm:$0xff] %vm345, 0.0
      %397 = vst.msk [vmem:[#allocation2 + $0x4d8] sm:$0xff] %vm345, 0.0
      %398 = vst.msk [vmem:[#allocation2 + $0x4f0] sm:$0xff] %vm345, 0.0
      %399 = vst.msk [vmem:[#allocation2 + $0x508] sm:$0xff] %vm345, 0.0
      %400 = vst.msk [vmem:[#allocation2 + $0x520] sm:$0xff] %vm345, 0.0
      %401 = vst.msk [vmem:[#allocation2 + $0x538] sm:$0xff] %vm345, 0.0
      %402 = vst.msk [vmem:[#allocation2 + $0x550] sm:$0xff] %vm345, 0.0
      %403 = vst.msk [vmem:[#allocation2 + $0x568] sm:$0xff] %vm345, 0.0
      %404 = vst.msk [vmem:[#allocation2 + $0x580] sm:$0xff] %vm345, 0.0
      %405 = vst.msk [vmem:[#allocation2 + $0x598] sm:$0xff] %vm345, 0.0
      %406 = vst.msk [vmem:[#allocation2 + $0x5b0] sm:$0xff] %vm345, 0.0
      %407 = vst.msk [vmem:[#allocation2 + $0x5c8] sm:$0xff] %vm345, 0.0
      %408 = vst.msk [vmem:[#allocation2 + $0x5e0] sm:$0xff] %vm345, 0.0
      %409 = vst.msk [vmem:[#allocation2 + $0x5f8] sm:$0xff] %vm345, 0.0
      %410 = vst.msk [vmem:[#allocation2 + $0x610] sm:$0xff] %vm345, 0.0
      %411 = vst.msk [vmem:[#allocation2 + $0x628] sm:$0xff] %vm345, 0.0
      %412 = vst.msk [vmem:[#allocation2 + $0x640] sm:$0xff] %vm345, 0.0
      %413 = vst.msk [vmem:[#allocation2 + $0x658] sm:$0xff] %vm345, 0.0
      %414 = vst.msk [vmem:[#allocation2 + $0x670] sm:$0xff] %vm345, 0.0
      %415 = vst.msk [vmem:[#allocation2 + $0x688] sm:$0xff] %vm345, 0.0
      %416 = vst.msk [vmem:[#allocation2 + $0x6a0] sm:$0xff] %vm345, 0.0
      %417 = vst.msk [vmem:[#allocation2 + $0x6b8] sm:$0xff] %vm345, 0.0
      %v418 = vld [vmem:[%s245] sm:$0xff]
      %v419 = vld [vmem:[%s245 + $0x8] sm:$0xff]
      %v420 = vld [vmem:[%s245 + $0x10] sm:$0xff]
      %v421 = vld [vmem:[%s245 + $0x18] sm:$0xff]
      %v422 = vld [vmem:[%s245 + $0x20] sm:$0xff]
      %v423 = vld [vmem:[%s245 + $0x28] sm:$0xff]
      %v424 = vld [vmem:[%s245 + $0x30] sm:$0xff]
      %v425 = vld [vmem:[%s245 + $0x38] sm:$0xff]
      %v426 = vld [vmem:[%s245 + $0x40] sm:$0xff]
      %v427 = vld [vmem:[%s245 + $0x48] sm:$0xff]
      %v428 = vld [vmem:[%s245 + $0x50] sm:$0xff]
      %v429 = vld [vmem:[%s245 + $0x58] sm:$0xff]
      %v430 = vld [vmem:[%s245 + $0x60] sm:$0xff]
      %v431 = vld [vmem:[%s245 + $0x68] sm:$0xff]
      %v432 = vld [vmem:[%s245 + $0x70] sm:$0xff]
      %v433 = vld [vmem:[%s245 + $0x78] sm:$0xff]
      %v434 = vld [vmem:[%s245 + $0x80] sm:$0xff]
      %v435 = vld [vmem:[%s245 + $0x88] sm:$0xff]
      %v436 = vld [vmem:[%s245 + $0x90] sm:$0xff]
      %v437 = vld [vmem:[%s245 + $0x98] sm:$0xff]
      %v438 = vld [vmem:[%s245 + $0xa0] sm:$0xff]
      %v439 = vld [vmem:[%s245 + $0xa8] sm:$0xff]
      %v440 = vld [vmem:[%s245 + $0xb0] sm:$0xff]
      %v441 = vld [vmem:[%s245 + $0xb8] sm:$0xff]
      %v442 = vld [vmem:[%s245 + $0xc0] sm:$0xff]
      %v443 = vld [vmem:[%s245 + $0xc8] sm:$0xff]
      %v444 = vld [vmem:[%s245 + $0xd0] sm:$0xff]
      %v445 = vld [vmem:[%s245 + $0xd8] sm:$0xff]
      %v446 = vld [vmem:[%s245 + $0xe0] sm:$0xff]
      %v447 = vld [vmem:[%s245 + $0xe8] sm:$0xff]
      %v448 = vld [vmem:[%s245 + $0xf0] sm:$0xff]
      %v449 = vld [vmem:[%s245 + $0xf8] sm:$0xff]
      %v450 = vld [vmem:[%s245 + $0x100] sm:$0xff]
      %v451 = vld [vmem:[%s245 + $0x108] sm:$0xff]
      %v452 = vld [vmem:[%s245 + $0x110] sm:$0xff]
      %v453 = vld [vmem:[%s245 + $0x118] sm:$0xff]
      %v454 = vld [vmem:[%s245 + $0x120] sm:$0xff]
      %v455 = vld [vmem:[%s245 + $0x128] sm:$0xff]
      %v456 = vld [vmem:[%s245 + $0x130] sm:$0xff]
      %v457 = vld [vmem:[%s245 + $0x138] sm:$0xff]
      %v458 = vld [vmem:[%s245 + $0x140] sm:$0xff]
      %v459 = vld [vmem:[%s245 + $0x148] sm:$0xff]
      %v460 = vld [vmem:[%s245 + $0x150] sm:$0xff]
      %v461 = vld [vmem:[%s245 + $0x158] sm:$0xff]
      %v462 = vld [vmem:[%s245 + $0x160] sm:$0xff]
      %v463 = vld [vmem:[%s245 + $0x168] sm:$0xff]
      %v464 = vld [vmem:[%s245 + $0x170] sm:$0xff]
      %v465 = vld [vmem:[%s245 + $0x178] sm:$0xff]
      %v466 = vld [vmem:[%s245 + $0x180] sm:$0xff]
      %v467 = vld [vmem:[%s245 + $0x188] sm:$0xff]
      %v468 = vld [vmem:[%s245 + $0x190] sm:$0xff]
      %v469 = vld [vmem:[%s245 + $0x198] sm:$0xff]
      %v470 = vld [vmem:[%s245 + $0x1a0] sm:$0xff]
      %v471 = vld [vmem:[%s245 + $0x1a8] sm:$0xff]
      %v472 = vld [vmem:[%s245 + $0x1b0] sm:$0xff]
      %v473 = vld [vmem:[%s245 + $0x1b8] sm:$0xff]
      %v474 = vld [vmem:[%s245 + $0x1c0] sm:$0xff]
      %v475 = vld [vmem:[%s245 + $0x1c8] sm:$0xff]
      %v476 = vld [vmem:[%s245 + $0x1d0] sm:$0xff]
      %v477 = vld [vmem:[%s245 + $0x1d8] sm:$0xff]
      %v478 = vld [vmem:[%s245 + $0x1e0] sm:$0xff]
      %v479 = vld [vmem:[%s245 + $0x1e8] sm:$0xff]
      %v480 = vld [vmem:[%s245 + $0x1f0] sm:$0xff]
      %v481 = vld [vmem:[%s245 + $0x1f8] sm:$0xff]
      %v482 = vld [vmem:[%s245 + $0x200] sm:$0xff]
      %v483 = vld [vmem:[%s245 + $0x208] sm:$0xff]
      %v484 = vld [vmem:[%s245 + $0x210] sm:$0xff]
      %v485 = vld [vmem:[%s245 + $0x218] sm:$0xff]
      %v486 = vld [vmem:[%s245 + $0x220] sm:$0xff]
      %v487 = vld [vmem:[%s245 + $0x228] sm:$0xff]
      %v488 = vld [vmem:[%s245 + $0x230] sm:$0xff]
      %v489 = vld [vmem:[%s245 + $0x238] sm:$0xff]
      %v490 = vld [vmem:[%s245 + $0x240] sm:$0xff]
      %v491 = vld [vmem:[%s245 + $0x248] sm:$0xff]
      %v492 = vld [vmem:[%s245 + $0x250] sm:$0xff]
      %v493 = vld [vmem:[%s245 + $0x258] sm:$0xff]
      %v494 = vld [vmem:[%s245 + $0x260] sm:$0xff]
      %v495 = vld [vmem:[%s245 + $0x268] sm:$0xff]
      %v496 = vld [vmem:[%s245 + $0x270] sm:$0xff]
      %v497 = vld [vmem:[%s245 + $0x278] sm:$0xff]
      %v498 = vld [vmem:[%s245 + $0x280] sm:$0xff]
      %v499 = vld [vmem:[%s245 + $0x288] sm:$0xff]
      %v500 = vld [vmem:[%s245 + $0x290] sm:$0xff]
      %v501 = vld [vmem:[%s245 + $0x298] sm:$0xff]
      %v502 = vld [vmem:[%s245 + $0x2a0] sm:$0xff]
      %v503 = vld [vmem:[%s245 + $0x2a8] sm:$0xff]
      %v504 = vld [vmem:[%s245 + $0x2b0] sm:$0xff]
      %v505 = vld [vmem:[%s245 + $0x2b8] sm:$0xff]
      %v506 = vld [vmem:[%s245 + $0x2c0] sm:$0xff]
      %v507 = vld [vmem:[%s245 + $0x2c8] sm:$0xff]
      %v508 = vld [vmem:[%s245 + $0x2d0] sm:$0xff]
      %v509 = vld [vmem:[%s245 + $0x2d8] sm:$0xff]
      %v510 = vld [vmem:[%s245 + $0x2e0] sm:$0xff]
      %v511 = vld [vmem:[%s245 + $0x2e8] sm:$0xff]
      %v512 = vld [vmem:[%s245 + $0x2f0] sm:$0xff]
      %v513 = vld [vmem:[%s245 + $0x2f8] sm:$0xff]
      %v514 = vld [vmem:[%s245 + $0x300] sm:$0xff]
      %v515 = vld [vmem:[%s245 + $0x308] sm:$0xff]
      %v516 = vld [vmem:[%s245 + $0x310] sm:$0xff]
      %v517 = vld [vmem:[%s245 + $0x318] sm:$0xff]
      %v518 = vld [vmem:[%s245 + $0x320] sm:$0xff]
      %v519 = vld [vmem:[%s245 + $0x328] sm:$0xff]
      %v520 = vld [vmem:[%s245 + $0x330] sm:$0xff]
      %v521 = vld [vmem:[%s245 + $0x338] sm:$0xff]
      %v522 = vld [vmem:[%s245 + $0x340] sm:$0xff]
      %v523 = vld [vmem:[%s245 + $0x348] sm:$0xff]
      %v524 = vld [vmem:[%s245 + $0x350] sm:$0xff]
      %v525 = vld [vmem:[%s245 + $0x358] sm:$0xff]
      %v526 = vld [vmem:[%s245 + $0x360] sm:$0xff]
      %v527 = vld [vmem:[%s245 + $0x368] sm:$0xff]
      %v528 = vld [vmem:[%s245 + $0x370] sm:$0xff]
      %v529 = vld [vmem:[%s245 + $0x378] sm:$0xff]
      %v530 = vld [vmem:[%s245 + $0x380] sm:$0xff]
      %v531 = vld [vmem:[%s245 + $0x388] sm:$0xff]
      %v532 = vld [vmem:[%s245 + $0x390] sm:$0xff]
      %v533 = vld [vmem:[%s245 + $0x398] sm:$0xff]
      %v534 = vld [vmem:[%s245 + $0x3a0] sm:$0xff]
      %v535 = vld [vmem:[%s245 + $0x3a8] sm:$0xff]
      %v536 = vld [vmem:[%s245 + $0x3b0] sm:$0xff]
      %v537 = vld [vmem:[%s245 + $0x3b8] sm:$0xff]
      %v538 = vld [vmem:[%s245 + $0x3c0] sm:$0xff]
      %v539 = vld [vmem:[%s245 + $0x3c8] sm:$0xff]
      %v540 = vld [vmem:[%s245 + $0x3d0] sm:$0xff]
      %v541 = vld [vmem:[%s245 + $0x3d8] sm:$0xff]
      %v542 = vld [vmem:[%s245 + $0x3e0] sm:$0xff]
      %v543 = vld [vmem:[%s245 + $0x3e8] sm:$0xff]
      %v544 = vld [vmem:[%s245 + $0x3f0] sm:$0xff]
      %v545 = vld [vmem:[%s245 + $0x3f8] sm:$0xff]
      %v546 = vld [vmem:[%s245 + $0x400] sm:$0xff]
      %v547 = vld [vmem:[%s245 + $0x408] sm:$0xff]
      %v548 = vld [vmem:[%s245 + $0x410] sm:$0xff]
      %v549 = vld [vmem:[%s245 + $0x418] sm:$0xff]
      %v550 = vld [vmem:[%s245 + $0x420] sm:$0xff]
      %v551 = vld [vmem:[%s245 + $0x428] sm:$0xff]
      %v552 = vld [vmem:[%s245 + $0x430] sm:$0xff]
      %v553 = vld [vmem:[%s245 + $0x438] sm:$0xff]
      %v554 = vld [vmem:[%s245 + $0x440] sm:$0xff]
      %v555 = vld [vmem:[%s245 + $0x448] sm:$0xff]
      %v556 = vld [vmem:[%s245 + $0x450] sm:$0xff]
      %v557 = vld [vmem:[%s245 + $0x458] sm:$0xff]
      %v558 = vld [vmem:[%s245 + $0x460] sm:$0xff]
      %v559 = vld [vmem:[%s245 + $0x468] sm:$0xff]
      %v560 = vld [vmem:[%s245 + $0x470] sm:$0xff]
      %v561 = vld [vmem:[%s245 + $0x478] sm:$0xff]
      %562 = vst [vmem:[#allocation2 + $0x8] sm:$0xff] %v418
      %vm563 = vcmask 556032
      %564 = vst.msk [vmem:[#allocation2 + $0x10] sm:$0xff] %vm563, %v419
      %565 = vst [vmem:[#allocation2 + $0x20] sm:$0xff] %v420
      %566 = vst.msk [vmem:[#allocation2 + $0x28] sm:$0xff] %vm563, %v421
      %567 = vst [vmem:[#allocation2 + $0x38] sm:$0xff] %v422
      %568 = vst.msk [vmem:[#allocation2 + $0x40] sm:$0xff] %vm563, %v423
      %569 = vst [vmem:[#allocation2 + $0x50] sm:$0xff] %v424
      %570 = vst.msk [vmem:[#allocation2 + $0x58] sm:$0xff] %vm563, %v425
      %571 = vst [vmem:[#allocation2 + $0x68] sm:$0xff] %v426
      %572 = vst.msk [vmem:[#allocation2 + $0x70] sm:$0xff] %vm563, %v427
      %573 = vst [vmem:[#allocation2 + $0x80] sm:$0xff] %v428
      %574 = vst.msk [vmem:[#allocation2 + $0x88] sm:$0xff] %vm563, %v429
      %575 = vst [vmem:[#allocation2 + $0x98] sm:$0xff] %v430
      %576 = vst.msk [vmem:[#allocation2 + $0xa0] sm:$0xff] %vm563, %v431
      %577 = vst [vmem:[#allocation2 + $0xb0] sm:$0xff] %v432
      %578 = vst.msk [vmem:[#allocation2 + $0xb8] sm:$0xff] %vm563, %v433
      %579 = vst [vmem:[#allocation2 + $0xc8] sm:$0xff] %v434
      %580 = vst.msk [vmem:[#allocation2 + $0xd0] sm:$0xff] %vm563, %v435
      %581 = vst [vmem:[#allocation2 + $0xe0] sm:$0xff] %v436
      %582 = vst.msk [vmem:[#allocation2 + $0xe8] sm:$0xff] %vm563, %v437
      %583 = vst [vmem:[#allocation2 + $0xf8] sm:$0xff] %v438
      %584 = vst.msk [vmem:[#allocation2 + $0x100] sm:$0xff] %vm563, %v439
      %585 = vst [vmem:[#allocation2 + $0x110] sm:$0xff] %v440
      %586 = vst.msk [vmem:[#allocation2 + $0x118] sm:$0xff] %vm563, %v441
      %587 = vst [vmem:[#allocation2 + $0x128] sm:$0xff] %v442
      %588 = vst.msk [vmem:[#allocation2 + $0x130] sm:$0xff] %vm563, %v443
      %589 = vst [vmem:[#allocation2 + $0x140] sm:$0xff] %v444
      %590 = vst.msk [vmem:[#allocation2 + $0x148] sm:$0xff] %vm563, %v445
      %591 = vst [vmem:[#allocation2 + $0x158] sm:$0xff] %v446
      %592 = vst.msk [vmem:[#allocation2 + $0x160] sm:$0xff] %vm563, %v447
      %593 = vst [vmem:[#allocation2 + $0x170] sm:$0xff] %v448
      %594 = vst.msk [vmem:[#allocation2 + $0x178] sm:$0xff] %vm563, %v449
      %595 = vst [vmem:[#allocation2 + $0x188] sm:$0xff] %v450
      %596 = vst.msk [vmem:[#allocation2 + $0x190] sm:$0xff] %vm563, %v451
      %597 = vst [vmem:[#allocation2 + $0x1a0] sm:$0xff] %v452
      %598 = vst.msk [vmem:[#allocation2 + $0x1a8] sm:$0xff] %vm563, %v453
      %599 = vst [vmem:[#allocation2 + $0x1b8] sm:$0xff] %v454
      %600 = vst.msk [vmem:[#allocation2 + $0x1c0] sm:$0xff] %vm563, %v455
      %601 = vst [vmem:[#allocation2 + $0x1d0] sm:$0xff] %v456
      %602 = vst.msk [vmem:[#allocation2 + $0x1d8] sm:$0xff] %vm563, %v457
      %603 = vst [vmem:[#allocation2 + $0x1e8] sm:$0xff] %v458
      %604 = vst.msk [vmem:[#allocation2 + $0x1f0] sm:$0xff] %vm563, %v459
      %605 = vst [vmem:[#allocation2 + $0x200] sm:$0xff] %v460
      %606 = vst.msk [vmem:[#allocation2 + $0x208] sm:$0xff] %vm563, %v461
      %607 = vst [vmem:[#allocation2 + $0x218] sm:$0xff] %v462
      %608 = vst.msk [vmem:[#allocation2 + $0x220] sm:$0xff] %vm563, %v463
      %609 = vst [vmem:[#allocation2 + $0x230] sm:$0xff] %v464
      %610 = vst.msk [vmem:[#allocation2 + $0x238] sm:$0xff] %vm563, %v465
      %611 = vst [vmem:[#allocation2 + $0x248] sm:$0xff] %v466
      %612 = vst.msk [vmem:[#allocation2 + $0x250] sm:$0xff] %vm563, %v467
      %613 = vst [vmem:[#allocation2 + $0x260] sm:$0xff] %v468
      %614 = vst.msk [vmem:[#allocation2 + $0x268] sm:$0xff] %vm563, %v469
      %615 = vst [vmem:[#allocation2 + $0x278] sm:$0xff] %v470
      %616 = vst.msk [vmem:[#allocation2 + $0x280] sm:$0xff] %vm563, %v471
      %617 = vst [vmem:[#allocation2 + $0x290] sm:$0xff] %v472
      %618 = vst.msk [vmem:[#allocation2 + $0x298] sm:$0xff] %vm563, %v473
      %619 = vst [vmem:[#allocation2 + $0x2a8] sm:$0xff] %v474
      %620 = vst.msk [vmem:[#allocation2 + $0x2b0] sm:$0xff] %vm563, %v475
      %621 = vst [vmem:[#allocation2 + $0x2c0] sm:$0xff] %v476
      %622 = vst.msk [vmem:[#allocation2 + $0x2c8] sm:$0xff] %vm563, %v477
      %623 = vst [vmem:[#allocation2 + $0x2d8] sm:$0xff] %v478
      %624 = vst.msk [vmem:[#allocation2 + $0x2e0] sm:$0xff] %vm563, %v479
      %625 = vst [vmem:[#allocation2 + $0x2f0] sm:$0xff] %v480
      %626 = vst.msk [vmem:[#allocation2 + $0x2f8] sm:$0xff] %vm563, %v481
      %627 = vst [vmem:[#allocation2 + $0x308] sm:$0xff] %v482
      %628 = vst.msk [vmem:[#allocation2 + $0x310] sm:$0xff] %vm563, %v483
      %629 = vst [vmem:[#allocation2 + $0x320] sm:$0xff] %v484
      %630 = vst.msk [vmem:[#allocation2 + $0x328] sm:$0xff] %vm563, %v485
      %631 = vst [vmem:[#allocation2 + $0x338] sm:$0xff] %v486
      %632 = vst.msk [vmem:[#allocation2 + $0x340] sm:$0xff] %vm563, %v487
      %633 = vst [vmem:[#allocation2 + $0x350] sm:$0xff] %v488
      %634 = vst.msk [vmem:[#allocation2 + $0x358] sm:$0xff] %vm563, %v489
      %635 = vst [vmem:[#allocation2 + $0x368] sm:$0xff] %v490
      %636 = vst.msk [vmem:[#allocation2 + $0x370] sm:$0xff] %vm563, %v491
      %637 = vst [vmem:[#allocation2 + $0x380] sm:$0xff] %v492
      %638 = vst.msk [vmem:[#allocation2 + $0x388] sm:$0xff] %vm563, %v493
      %639 = vst [vmem:[#allocation2 + $0x398] sm:$0xff] %v494
      %640 = vst.msk [vmem:[#allocation2 + $0x3a0] sm:$0xff] %vm563, %v495
      %641 = vst [vmem:[#allocation2 + $0x3b0] sm:$0xff] %v496
      %642 = vst.msk [vmem:[#allocation2 + $0x3b8] sm:$0xff] %vm563, %v497
      %643 = vst [vmem:[#allocation2 + $0x3c8] sm:$0xff] %v498
      %644 = vst.msk [vmem:[#allocation2 + $0x3d0] sm:$0xff] %vm563, %v499
      %645 = vst [vmem:[#allocation2 + $0x3e0] sm:$0xff] %v500
      %646 = vst.msk [vmem:[#allocation2 + $0x3e8] sm:$0xff] %vm563, %v501
      %647 = vst [vmem:[#allocation2 + $0x3f8] sm:$0xff] %v502
      %648 = vst.msk [vmem:[#allocation2 + $0x400] sm:$0xff] %vm563, %v503
      %649 = vst [vmem:[#allocation2 + $0x410] sm:$0xff] %v504
      %650 = vst.msk [vmem:[#allocation2 + $0x418] sm:$0xff] %vm563, %v505
      %651 = vst [vmem:[#allocation2 + $0x428] sm:$0xff] %v506
      %652 = vst.msk [vmem:[#allocation2 + $0x430] sm:$0xff] %vm563, %v507
      %653 = vst [vmem:[#allocation2 + $0x440] sm:$0xff] %v508
      %654 = vst.msk [vmem:[#allocation2 + $0x448] sm:$0xff] %vm563, %v509
      %655 = vst [vmem:[#allocation2 + $0x458] sm:$0xff] %v510
      %656 = vst.msk [vmem:[#allocation2 + $0x460] sm:$0xff] %vm563, %v511
      %657 = vst [vmem:[#allocation2 + $0x470] sm:$0xff] %v512
      %658 = vst.msk [vmem:[#allocation2 + $0x478] sm:$0xff] %vm563, %v513
      %659 = vst [vmem:[#allocation2 + $0x488] sm:$0xff] %v514
      %660 = vst.msk [vmem:[#allocation2 + $0x490] sm:$0xff] %vm563, %v515
      %661 = vst [vmem:[#allocation2 + $0x4a0] sm:$0xff] %v516
      %662 = vst.msk [vmem:[#allocation2 + $0x4a8] sm:$0xff] %vm563, %v517
      %663 = vst [vmem:[#allocation2 + $0x4b8] sm:$0xff] %v518
      %664 = vst.msk [vmem:[#allocation2 + $0x4c0] sm:$0xff] %vm563, %v519
      %665 = vst [vmem:[#allocation2 + $0x4d0] sm:$0xff] %v520
      %666 = vst.msk [vmem:[#allocation2 + $0x4d8] sm:$0xff] %vm563, %v521
      %667 = vst [vmem:[#allocation2 + $0x4e8] sm:$0xff] %v522
      %668 = vst.msk [vmem:[#allocation2 + $0x4f0] sm:$0xff] %vm563, %v523
      %669 = vst [vmem:[#allocation2 + $0x500] sm:$0xff] %v524
      %670 = vst.msk [vmem:[#allocation2 + $0x508] sm:$0xff] %vm563, %v525
      %671 = vst [vmem:[#allocation2 + $0x518] sm:$0xff] %v526
      %672 = vst.msk [vmem:[#allocation2 + $0x520] sm:$0xff] %vm563, %v527
      %673 = vst [vmem:[#allocation2 + $0x530] sm:$0xff] %v528
      %674 = vst.msk [vmem:[#allocation2 + $0x538] sm:$0xff] %vm563, %v529
      %675 = vst [vmem:[#allocation2 + $0x548] sm:$0xff] %v530
      %676 = vst.msk [vmem:[#allocation2 + $0x550] sm:$0xff] %vm563, %v531
      %677 = vst [vmem:[#allocation2 + $0x560] sm:$0xff] %v532
      %678 = vst.msk [vmem:[#allocation2 + $0x568] sm:$0xff] %vm563, %v533
      %679 = vst [vmem:[#allocation2 + $0x578] sm:$0xff] %v534
      %680 = vst.msk [vmem:[#allocation2 + $0x580] sm:$0xff] %vm563, %v535
      %681 = vst [vmem:[#allocation2 + $0x590] sm:$0xff] %v536
      %682 = vst.msk [vmem:[#allocation2 + $0x598] sm:$0xff] %vm563, %v537
      %683 = vst [vmem:[#allocation2 + $0x5a8] sm:$0xff] %v538
      %684 = vst.msk [vmem:[#allocation2 + $0x5b0] sm:$0xff] %vm563, %v539
      %685 = vst [vmem:[#allocation2 + $0x5c0] sm:$0xff] %v540
      %686 = vst.msk [vmem:[#allocation2 + $0x5c8] sm:$0xff] %vm563, %v541
      %687 = vst [vmem:[#allocation2 + $0x5d8] sm:$0xff] %v542
      %688 = vst.msk [vmem:[#allocation2 + $0x5e0] sm:$0xff] %vm563, %v543
      %689 = vst [vmem:[#allocation2 + $0x5f0] sm:$0xff] %v544
      %690 = vst.msk [vmem:[#allocation2 + $0x5f8] sm:$0xff] %vm563, %v545
      %691 = vst [vmem:[#allocation2 + $0x608] sm:$0xff] %v546
      %692 = vst.msk [vmem:[#allocation2 + $0x610] sm:$0xff] %vm563, %v547
      %693 = vst [vmem:[#allocation2 + $0x620] sm:$0xff] %v548
      %694 = vst.msk [vmem:[#allocation2 + $0x628] sm:$0xff] %vm563, %v549
      %695 = vst [vmem:[#allocation2 + $0x638] sm:$0xff] %v550
      %696 = vst.msk [vmem:[#allocation2 + $0x640] sm:$0xff] %vm563, %v551
      %697 = vst [vmem:[#allocation2 + $0x650] sm:$0xff] %v552
      %698 = vst.msk [vmem:[#allocation2 + $0x658] sm:$0xff] %vm563, %v553
      %699 = vst [vmem:[#allocation2 + $0x668] sm:$0xff] %v554
      %700 = vst.msk [vmem:[#allocation2 + $0x670] sm:$0xff] %vm563, %v555
      %701 = vst [vmem:[#allocation2 + $0x680] sm:$0xff] %v556
      %702 = vst.msk [vmem:[#allocation2 + $0x688] sm:$0xff] %vm563, %v557
      %703 = vst [vmem:[#allocation2 + $0x698] sm:$0xff] %v558
      %704 = vst.msk [vmem:[#allocation2 + $0x6a0] sm:$0xff] %vm563, %v559
      %705 = vst [vmem:[#allocation2 + $0x6b0] sm:$0xff] %v560
      %706 = vst.msk [vmem:[#allocation2 + $0x6b8] sm:$0xff] %vm563, %v561
      %v707 = vlaneseq
      %v708 = vand.u32 %v707, 127
      %v709 = vadd.s32 %v708, 128
      %vm710 = vcmp.lt.s32.totalorder %v708, 0
      %v711 = vsub.s32 0, %v708
      %v712 = vsel %vm710, %v711, %v708
      %v713 = vand.u32 %v712, 65535
      %v714 = vshrl.u32 %v712, 16
      %v716 = vmul.u32 %v713, 9362
      %v717 = vmul.u32 %v713, 37449
      %v718 = vmul.u32 %v714, 9362
      %v719 = vmul.u32 %v714, 37449
      %v720 = vshll.u32 %v717, 16
      %v721 = vshrl.u32 %v717, 16
      %v722 = vshll.u32 %v718, 16
      %v723 = vshrl.u32 %v718, 16
      %vm724 = vc.u32 %v716, %v720
      %v725 = vsel %vm724, 1, 0
      %v726 = vadd.s32 %v716, %v720
      %v727 = vadd.s32 %v719, %v725
      %vm728 = vc.u32 %v726, %v722
      %v729 = vsel %vm728, 1, 0
      %v730 = vadd.s32 %v726, %v722
      %v731 = vadd.s32 %v727, %v729
      %v732 = vadd.s32 %v731, %v721
      %v733 = vadd.s32 %v732, %v723
      %vm734 = vc.u32 %v730, 2454267026
      %v735 = vsel %vm734, 1, 0
      %v736 = vadd.s32 %v733, %v735
      %v737 = vshrl.u32 %v736, 3
      %v738 = vmul.u32 %v737, 14
      %v739 = vsub.s32 %v712, %v738
      %v740 = vsub.s32 0, %v739
      %v741 = vsel %vm710, %v740, %v739
      %vm742 = vcmp.lt.s32.totalorder %v709, 0
      %v743 = vsub.s32 0, %v709
      %v744 = vsel %vm742, %v743, %v709
      %v745 = vand.u32 %v744, 65535
      %v746 = vshrl.u32 %v744, 16
      %v748 = vmul.u32 %v745, 9362
      %v749 = vmul.u32 %v745, 37449
      %v750 = vmul.u32 %v746, 9362
      %v751 = vmul.u32 %v746, 37449
      %v752 = vshll.u32 %v749, 16
      %v753 = vshrl.u32 %v749, 16
      %v754 = vshll.u32 %v750, 16
      %v755 = vshrl.u32 %v750, 16
      %vm756 = vc.u32 %v748, %v752
      %v757 = vsel %vm756, 1, 0
      %v758 = vadd.s32 %v748, %v752
      %v759 = vadd.s32 %v751, %v757
      %vm760 = vc.u32 %v758, %v754
      %v761 = vsel %vm760, 1, 0
      %v762 = vadd.s32 %v758, %v754
      %v763 = vadd.s32 %v759, %v761
      %v764 = vadd.s32 %v763, %v753
      %v765 = vadd.s32 %v764, %v755
      %vm766 = vc.u32 %v762, 2454267026
      %v767 = vsel %vm766, 1, 0
      %v768 = vadd.s32 %v765, %v767
      %v769 = vshrl.u32 %v768, 3
      %v770 = vmul.u32 %v769, 14
      %v771 = vsub.s32 %v744, %v770
      %v772 = vsub.s32 0, %v771
      %v773 = vsel %vm742, %v772, %v771
      %vm774 = vcmp.ne.s32.totalorder %v741, 0
      %vm775 = vcmp.ne.s32.totalorder %v773, 0
      %vm776 = vcmp.lt.s32.totalorder %v741, 0
      %vm777 = vcmp.lt.s32.totalorder %v773, 0
      %vm778 = vmand %vm776, %vm774
      %vm779 = vmand %vm777, %vm775
      %v780 = vadd.s32 %v741, 14
      %v781 = vadd.s32 %v773, 14
      %v782 = vsel %vm778, %v780, %v741
      %v783 = vsel %vm779, %v781, %v773
      %vm784 = vcmp.ge.s32.totalorder %v782, 1
      %vm785 = vcmp.ge.s32.totalorder %v783, 1
      %vm786 = vcmp.le.s32.totalorder %v782, 12
      %vm787 = vcmp.le.s32.totalorder %v783, 12
      loop: start=0, step=1, limit=9
      $region37: #{dwconv_bn.1} parent=35 // loop_pre_header
        _
      $region38: #{dwconv_bn.1} parent=35 // loop_header
        %s789 = sphi 0, %s793
        %p790 = scmp.ge.s32.totalorder %s789, 9
      $region39: #{dwconv_bn.1} parent=35 // loop_header_branch
        %792 = sbr.rel (%p790) target = $region43
      $region40: #{dwconv_bn.1} parent=35 // loop_body
        %s794 = smul.u32 %s789, 64
        %s795 = sshra.s32 %s794, 3
        %s796 = sand.u32 %s794, 7
        %s797 = smul.u32 %s795, 3
        %s798 = smul.addr %s797, 8
        %s799 = scalar_lea.vmem [#allocation2], %s798
        %v800 = vld [vmem:[%s799] sm:$0xff]
        %v801 = vld [vmem:[%s799 + $0x8] sm:$0xff]
        %v802 = vld [vmem:[%s799 + $0x10] sm:$0xff]
        %v803 = vld [vmem:[%s799 + $0x18] sm:$0xff]
        %v804 = vld [vmem:[%s799 + $0x20] sm:$0xff]
        %v805 = vld [vmem:[%s799 + $0x28] sm:$0xff]
        %v806 = vld [vmem:[%s799 + $0x30] sm:$0xff]
        %v807 = vld [vmem:[%s799 + $0x38] sm:$0xff]
        %v808 = vld [vmem:[%s799 + $0x40] sm:$0xff]
        %v809 = vld [vmem:[%s799 + $0x48] sm:$0xff]
        %v810 = vld [vmem:[%s799 + $0x50] sm:$0xff]
        %v811 = vld [vmem:[%s799 + $0x58] sm:$0xff]
        %v812 = vld [vmem:[%s799 + $0x60] sm:$0xff]
        %v813 = vld [vmem:[%s799 + $0x68] sm:$0xff]
        %v814 = vld [vmem:[%s799 + $0x70] sm:$0xff]
        %v815 = vld [vmem:[%s799 + $0x78] sm:$0xff]
        %v816 = vld [vmem:[%s799 + $0x80] sm:$0xff]
        %v817 = vld [vmem:[%s799 + $0x88] sm:$0xff]
        %v818 = vld [vmem:[%s799 + $0x90] sm:$0xff]
        %v819 = vld [vmem:[%s799 + $0x98] sm:$0xff]
        %v820 = vld [vmem:[%s799 + $0xa0] sm:$0xff]
        %v821 = vld [vmem:[%s799 + $0xa8] sm:$0xff]
        %v822 = vld [vmem:[%s799 + $0xb0] sm:$0xff]
        %v823 = vld [vmem:[%s799 + $0xb8] sm:$0xff]
        %s824 = scalar_lea.vmem %s251, %s794
        %v825 = vld [vmem:[%s824] sm:$0xff]
        %v826 = vld [vmem:[%s824 + $0x8] sm:$0xff]
        %v827 = vld [vmem:[%s824 + $0x10] sm:$0xff]
        %v828 = vld [vmem:[%s824 + $0x18] sm:$0xff]
        %v829 = vld [vmem:[%s824 + $0x20] sm:$0xff]
        %v830 = vld [vmem:[%s824 + $0x28] sm:$0xff]
        %v831 = vld [vmem:[%s824 + $0x30] sm:$0xff]
        %v832 = vld [vmem:[%s824 + $0x38] sm:$0xff]
        %834 = vset.pattern.permute.xlu0 1
        %835 = vperm.xlu0 %834, %v825
        %v836 = vpop.permute.xlu0 %835
        %839 = vset.pattern.permute.xlu0 1
        %840 = vperm.xlu0 %839, %v826
        %v841 = vpop.permute.xlu0 %840
        %844 = vset.pattern.permute.xlu0 1
        %845 = vperm.xlu0 %844, %v827
        %v846 = vpop.permute.xlu0 %845
        %849 = vset.pattern.permute.xlu0 1
        %850 = vperm.xlu0 %849, %v828
        %v851 = vpop.permute.xlu0 %850
        %854 = vset.pattern.permute.xlu0 1
        %855 = vperm.xlu0 %854, %v829
        %v856 = vpop.permute.xlu0 %855
        %859 = vset.pattern.permute.xlu0 1
        %860 = vperm.xlu0 %859, %v830
        %v861 = vpop.permute.xlu0 %860
        %864 = vset.pattern.permute.xlu0 1
        %865 = vperm.xlu0 %864, %v831
        %v866 = vpop.permute.xlu0 %865
        %869 = vset.pattern.permute.xlu0 1
        %870 = vperm.xlu0 %869, %v832
        %v871 = vpop.permute.xlu0 %870
        %v873 = vmul.f32 %v800, %v836
        %v874 = vmul.f32 %v801, %v836
        %v875 = vmul.f32 %v802, %v836
        %v876 = vmul.f32 %v803, %v841
        %v877 = vmul.f32 %v804, %v841
        %v878 = vmul.f32 %v805, %v841
        %v879 = vmul.f32 %v806, %v846
        %v880 = vmul.f32 %v807, %v846
        %v881 = vmul.f32 %v808, %v846
        %v882 = vmul.f32 %v809, %v851
        %v883 = vmul.f32 %v810, %v851
        %v884 = vmul.f32 %v811, %v851
        %v885 = vmul.f32 %v812, %v856
        %v886 = vmul.f32 %v813, %v856
        %v887 = vmul.f32 %v814, %v856
        %v888 = vmul.f32 %v815, %v861
        %v889 = vmul.f32 %v816, %v861
        %v890 = vmul.f32 %v817, %v861
        %v891 = vmul.f32 %v818, %v866
        %v892 = vmul.f32 %v819, %v866
        %v893 = vmul.f32 %v820, %v866
        %v894 = vmul.f32 %v821, %v871
        %v895 = vmul.f32 %v822, %v871
        %v896 = vmul.f32 %v823, %v871
        %897 = vset.pattern.permute.xlu0 4
        %898 = vperm.xlu0 %897, %v825
        %v899 = vpop.permute.xlu0 %898
        %901 = vset.pattern.permute.xlu0 4
        %902 = vperm.xlu0 %901, %v826
        %v903 = vpop.permute.xlu0 %902
        %905 = vset.pattern.permute.xlu0 4
        %906 = vperm.xlu0 %905, %v827
        %v907 = vpop.permute.xlu0 %906
        %909 = vset.pattern.permute.xlu0 4
        %910 = vperm.xlu0 %909, %v828
        %v911 = vpop.permute.xlu0 %910
        %913 = vset.pattern.permute.xlu0 4
        %914 = vperm.xlu0 %913, %v829
        %v915 = vpop.permute.xlu0 %914
        %917 = vset.pattern.permute.xlu0 4
        %918 = vperm.xlu0 %917, %v830
        %v919 = vpop.permute.xlu0 %918
        %921 = vset.pattern.permute.xlu0 4
        %922 = vperm.xlu0 %921, %v831
        %v923 = vpop.permute.xlu0 %922
        %925 = vset.pattern.permute.xlu0 4
        %926 = vperm.xlu0 %925, %v832
        %v927 = vpop.permute.xlu0 %926
        %v929 = vmul.f32 %v801, %v899
        %v930 = vmul.f32 %v802, %v899
        %v931 = vmul.f32 %v804, %v903
        %v932 = vmul.f32 %v805, %v903
        %v933 = vmul.f32 %v807, %v907
        %v934 = vmul.f32 %v808, %v907
        %v935 = vmul.f32 %v810, %v911
        %v936 = vmul.f32 %v811, %v911
        %v937 = vmul.f32 %v813, %v915
        %v938 = vmul.f32 %v814, %v915
        %v939 = vmul.f32 %v816, %v919
        %v940 = vmul.f32 %v817, %v919
        %v941 = vmul.f32 %v819, %v923
        %v942 = vmul.f32 %v820, %v923
        %v943 = vmul.f32 %v822, %v927
        %v944 = vmul.f32 %v823, %v927
        %961 = vrot.lane.b32.xlu0 %v929, 114
        %v962 = vpop.permute.xlu0 %961
        %963 = vrot.lane.b32.xlu0 %v930, 114
        %v964 = vpop.permute.xlu0 %963
        %965 = vrot.lane.b32.xlu0 %v931, 114
        %v966 = vpop.permute.xlu0 %965
        %967 = vrot.lane.b32.xlu0 %v932, 114
        %v968 = vpop.permute.xlu0 %967
        %969 = vrot.lane.b32.xlu0 %v933, 114
        %v970 = vpop.permute.xlu0 %969
        %971 = vrot.lane.b32.xlu0 %v934, 114
        %v972 = vpop.permute.xlu0 %971
        %973 = vrot.lane.b32.xlu0 %v935, 114
        %v974 = vpop.permute.xlu0 %973
        %975 = vrot.lane.b32.xlu0 %v936, 114
        %v976 = vpop.permute.xlu0 %975
        %977 = vrot.lane.b32.xlu0 %v937, 114
        %v978 = vpop.permute.xlu0 %977
        %979 = vrot.lane.b32.xlu0 %v938, 114
        %v980 = vpop.permute.xlu0 %979
        %981 = vrot.lane.b32.xlu0 %v939, 114
        %v982 = vpop.permute.xlu0 %981
        %983 = vrot.lane.b32.xlu0 %v940, 114
        %v984 = vpop.permute.xlu0 %983
        %985 = vrot.lane.b32.xlu0 %v941, 114
        %v986 = vpop.permute.xlu0 %985
        %987 = vrot.lane.b32.xlu0 %v942, 114
        %v988 = vpop.permute.xlu0 %987
        %989 = vrot.lane.b32.xlu0 %v943, 114
        %v990 = vpop.permute.xlu0 %989
        %991 = vrot.lane.b32.xlu0 %v944, 114
        %v992 = vpop.permute.xlu0 %991
        %vm993 = vcmask 932864
        %v994 = vsel %vm993, %v962, %v964
        %v995 = vsel %vm993, %v966, %v968
        %v996 = vsel %vm993, %v970, %v972
        %v997 = vsel %vm993, %v974, %v976
        %v998 = vsel %vm993, %v978, %v980
        %v999 = vsel %vm993, %v982, %v984
        %v1000 = vsel %vm993, %v986, %v988
        %v1001 = vsel %vm993, %v990, %v992
        %v1026 = vadd.f32 %v873, %v962
        %v1027 = vadd.f32 %v874, %v994
        %v1028 = vadd.f32 %v875, %v964
        %v1029 = vadd.f32 %v876, %v966
        %v1030 = vadd.f32 %v877, %v995
        %v1031 = vadd.f32 %v878, %v968
        %v1032 = vadd.f32 %v879, %v970
        %v1033 = vadd.f32 %v880, %v996
        %v1034 = vadd.f32 %v881, %v972
        %v1035 = vadd.f32 %v882, %v974
        %v1036 = vadd.f32 %v883, %v997
        %v1037 = vadd.f32 %v884, %v976
        %v1038 = vadd.f32 %v885, %v978
        %v1039 = vadd.f32 %v886, %v998
        %v1040 = vadd.f32 %v887, %v980
        %v1041 = vadd.f32 %v888, %v982
        %v1042 = vadd.f32 %v889, %v999
        %v1043 = vadd.f32 %v890, %v984
        %v1044 = vadd.f32 %v891, %v986
        %v1045 = vadd.f32 %v892, %v1000
        %v1046 = vadd.f32 %v893, %v988
        %v1047 = vadd.f32 %v894, %v990
        %v1048 = vadd.f32 %v895, %v1001
        %v1049 = vadd.f32 %v896, %v992
        %1050 = vset.pattern.permute.xlu0 7
        %1051 = vperm.xlu0 %1050, %v825
        %v1052 = vpop.permute.xlu0 %1051
        %1054 = vset.pattern.permute.xlu0 7
        %1055 = vperm.xlu0 %1054, %v826
        %v1056 = vpop.permute.xlu0 %1055
        %1058 = vset.pattern.permute.xlu0 7
        %1059 = vperm.xlu0 %1058, %v827
        %v1060 = vpop.permute.xlu0 %1059
        %1062 = vset.pattern.permute.xlu0 7
        %1063 = vperm.xlu0 %1062, %v828
        %v1064 = vpop.permute.xlu0 %1063
        %1066 = vset.pattern.permute.xlu0 7
        %1067 = vperm.xlu0 %1066, %v829
        %v1068 = vpop.permute.xlu0 %1067
        %1070 = vset.pattern.permute.xlu0 7
        %1071 = vperm.xlu0 %1070, %v830
        %v1072 = vpop.permute.xlu0 %1071
        %1074 = vset.pattern.permute.xlu0 7
        %1075 = vperm.xlu0 %1074, %v831
        %v1076 = vpop.permute.xlu0 %1075
        %1078 = vset.pattern.permute.xlu0 7
        %1079 = vperm.xlu0 %1078, %v832
        %v1080 = vpop.permute.xlu0 %1079
        %v1082 = vmul.f32 %v801, %v1052
        %v1083 = vmul.f32 %v802, %v1052
        %v1084 = vmul.f32 %v804, %v1056
        %v1085 = vmul.f32 %v805, %v1056
        %v1086 = vmul.f32 %v807, %v1060
        %v1087 = vmul.f32 %v808, %v1060
        %v1088 = vmul.f32 %v810, %v1064
        %v1089 = vmul.f32 %v811, %v1064
        %v1090 = vmul.f32 %v813, %v1068
        %v1091 = vmul.f32 %v814, %v1068
        %v1092 = vmul.f32 %v816, %v1072
        %v1093 = vmul.f32 %v817, %v1072
        %v1094 = vmul.f32 %v819, %v1076
        %v1095 = vmul.f32 %v820, %v1076
        %v1096 = vmul.f32 %v822, %v1080
        %v1097 = vmul.f32 %v823, %v1080
        %1114 = vrot.lane.b32.xlu0 %v1082, 100
        %v1115 = vpop.permute.xlu0 %1114
        %1116 = vrot.lane.b32.xlu0 %v1083, 100
        %v1117 = vpop.permute.xlu0 %1116
        %1118 = vrot.lane.b32.xlu0 %v1084, 100
        %v1119 = vpop.permute.xlu0 %1118
        %1120 = vrot.lane.b32.xlu0 %v1085, 100
        %v1121 = vpop.permute.xlu0 %1120
        %1122 = vrot.lane.b32.xlu0 %v1086, 100
        %v1123 = vpop.permute.xlu0 %1122
        %1124 = vrot.lane.b32.xlu0 %v1087, 100
        %v1125 = vpop.permute.xlu0 %1124
        %1126 = vrot.lane.b32.xlu0 %v1088, 100
        %v1127 = vpop.permute.xlu0 %1126
        %1128 = vrot.lane.b32.xlu0 %v1089, 100
        %v1129 = vpop.permute.xlu0 %1128
        %1130 = vrot.lane.b32.xlu0 %v1090, 100
        %v1131 = vpop.permute.xlu0 %1130
        %1132 = vrot.lane.b32.xlu0 %v1091, 100
        %v1133 = vpop.permute.xlu0 %1132
        %1134 = vrot.lane.b32.xlu0 %v1092, 100
        %v1135 = vpop.permute.xlu0 %1134
        %1136 = vrot.lane.b32.xlu0 %v1093, 100
        %v1137 = vpop.permute.xlu0 %1136
        %1138 = vrot.lane.b32.xlu0 %v1094, 100
        %v1139 = vpop.permute.xlu0 %1138
        %1140 = vrot.lane.b32.xlu0 %v1095, 100
        %v1141 = vpop.permute.xlu0 %1140
        %1142 = vrot.lane.b32.xlu0 %v1096, 100
        %v1143 = vpop.permute.xlu0 %1142
        %1144 = vrot.lane.b32.xlu0 %v1097, 100
        %v1145 = vpop.permute.xlu0 %1144
        %vm1146 = vcmask 818176
        %v1147 = vsel %vm1146, %v1115, %v1117
        %v1148 = vsel %vm1146, %v1119, %v1121
        %v1149 = vsel %vm1146, %v1123, %v1125
        %v1150 = vsel %vm1146, %v1127, %v1129
        %v1151 = vsel %vm1146, %v1131, %v1133
        %v1152 = vsel %vm1146, %v1135, %v1137
        %v1153 = vsel %vm1146, %v1139, %v1141
        %v1154 = vsel %vm1146, %v1143, %v1145
        %v1179 = vadd.f32 %v1026, %v1115
        %v1180 = vadd.f32 %v1027, %v1147
        %v1181 = vadd.f32 %v1028, %v1117
        %v1182 = vadd.f32 %v1029, %v1119
        %v1183 = vadd.f32 %v1030, %v1148
        %v1184 = vadd.f32 %v1031, %v1121
        %v1185 = vadd.f32 %v1032, %v1123
        %v1186 = vadd.f32 %v1033, %v1149
        %v1187 = vadd.f32 %v1034, %v1125
        %v1188 = vadd.f32 %v1035, %v1127
        %v1189 = vadd.f32 %v1036, %v1150
        %v1190 = vadd.f32 %v1037, %v1129
        %v1191 = vadd.f32 %v1038, %v1131
        %v1192 = vadd.f32 %v1039, %v1151
        %v1193 = vadd.f32 %v1040, %v1133
        %v1194 = vadd.f32 %v1041, %v1135
        %v1195 = vadd.f32 %v1042, %v1152
        %v1196 = vadd.f32 %v1043, %v1137
        %v1197 = vadd.f32 %v1044, %v1139
        %v1198 = vadd.f32 %v1045, %v1153
        %v1199 = vadd.f32 %v1046, %v1141
        %v1200 = vadd.f32 %v1047, %v1143
        %v1201 = vadd.f32 %v1048, %v1154
        %v1202 = vadd.f32 %v1049, %v1145
        %1203 = vset.pattern.permute.xlu0 0
        %1204 = vperm.xlu0 %1203, %v825
        %v1205 = vpop.permute.xlu0 %1204
        %1207 = vset.pattern.permute.xlu0 0
        %1208 = vperm.xlu0 %1207, %v826
        %v1209 = vpop.permute.xlu0 %1208
        %1211 = vset.pattern.permute.xlu0 0
        %1212 = vperm.xlu0 %1211, %v827
        %v1213 = vpop.permute.xlu0 %1212
        %1215 = vset.pattern.permute.xlu0 0
        %1216 = vperm.xlu0 %1215, %v828
        %v1217 = vpop.permute.xlu0 %1216
        %1219 = vset.pattern.permute.xlu0 0
        %1220 = vperm.xlu0 %1219, %v829
        %v1221 = vpop.permute.xlu0 %1220
        %1223 = vset.pattern.permute.xlu0 0
        %1224 = vperm.xlu0 %1223, %v830
        %v1225 = vpop.permute.xlu0 %1224
        %1227 = vset.pattern.permute.xlu0 0
        %1228 = vperm.xlu0 %1227, %v831
        %v1229 = vpop.permute.xlu0 %1228
        %1231 = vset.pattern.permute.xlu0 0
        %1232 = vperm.xlu0 %1231, %v832
        %v1233 = vpop.permute.xlu0 %1232
        %v1235 = vmul.f32 %v800, %v1205
        %v1236 = vmul.f32 %v801, %v1205
        %v1237 = vmul.f32 %v802, %v1205
        %v1238 = vmul.f32 %v803, %v1209
        %v1239 = vmul.f32 %v804, %v1209
        %v1240 = vmul.f32 %v805, %v1209
        %v1241 = vmul.f32 %v806, %v1213
        %v1242 = vmul.f32 %v807, %v1213
        %v1243 = vmul.f32 %v808, %v1213
        %v1244 = vmul.f32 %v809, %v1217
        %v1245 = vmul.f32 %v810, %v1217
        %v1246 = vmul.f32 %v811, %v1217
        %v1247 = vmul.f32 %v812, %v1221
        %v1248 = vmul.f32 %v813, %v1221
        %v1249 = vmul.f32 %v814, %v1221
        %v1250 = vmul.f32 %v815, %v1225
        %v1251 = vmul.f32 %v816, %v1225
        %v1252 = vmul.f32 %v817, %v1225
        %v1253 = vmul.f32 %v818, %v1229
        %v1254 = vmul.f32 %v819, %v1229
        %v1255 = vmul.f32 %v820, %v1229
        %v1256 = vmul.f32 %v821, %v1233
        %v1257 = vmul.f32 %v822, %v1233
        %v1258 = vmul.f32 %v823, %v1233
        %1259 = vset.pattern.permute.xlu0 3
        %1260 = vperm.xlu0 %1259, %v825
        %v1261 = vpop.permute.xlu0 %1260
        %1263 = vset.pattern.permute.xlu0 3
        %1264 = vperm.xlu0 %1263, %v826
        %v1265 = vpop.permute.xlu0 %1264
        %1267 = vset.pattern.permute.xlu0 3
        %1268 = vperm.xlu0 %1267, %v827
        %v1269 = vpop.permute.xlu0 %1268
        %1271 = vset.pattern.permute.xlu0 3
        %1272 = vperm.xlu0 %1271, %v828
        %v1273 = vpop.permute.xlu0 %1272
        %1275 = vset.pattern.permute.xlu0 3
        %1276 = vperm.xlu0 %1275, %v829
        %v1277 = vpop.permute.xlu0 %1276
        %1279 = vset.pattern.permute.xlu0 3
        %1280 = vperm.xlu0 %1279, %v830
        %v1281 = vpop.permute.xlu0 %1280
        %1283 = vset.pattern.permute.xlu0 3
        %1284 = vperm.xlu0 %1283, %v831
        %v1285 = vpop.permute.xlu0 %1284
        %1287 = vset.pattern.permute.xlu0 3
        %1288 = vperm.xlu0 %1287, %v832
        %v1289 = vpop.permute.xlu0 %1288
        %v1291 = vmul.f32 %v800, %v1261
        %v1292 = vmul.f32 %v801, %v1261
        %v1293 = vmul.f32 %v802, %v1261
        %v1294 = vmul.f32 %v803, %v1265
        %v1295 = vmul.f32 %v804, %v1265
        %v1296 = vmul.f32 %v805, %v1265
        %v1297 = vmul.f32 %v806, %v1269
        %v1298 = vmul.f32 %v807, %v1269
        %v1299 = vmul.f32 %v808, %v1269
        %v1300 = vmul.f32 %v809, %v1273
        %v1301 = vmul.f32 %v810, %v1273
        %v1302 = vmul.f32 %v811, %v1273
        %v1303 = vmul.f32 %v812, %v1277
        %v1304 = vmul.f32 %v813, %v1277
        %v1305 = vmul.f32 %v814, %v1277
        %v1306 = vmul.f32 %v815, %v1281
        %v1307 = vmul.f32 %v816, %v1281
        %v1308 = vmul.f32 %v817, %v1281
        %v1309 = vmul.f32 %v818, %v1285
        %v1310 = vmul.f32 %v819, %v1285
        %v1311 = vmul.f32 %v820, %v1285
        %v1312 = vmul.f32 %v821, %v1289
        %v1313 = vmul.f32 %v822, %v1289
        %v1314 = vmul.f32 %v823, %v1289
        %1339 = vrot.lane.b32.xlu0 %v1291, 114
        %v1340 = vpop.permute.xlu0 %1339
        %1341 = vrot.lane.b32.xlu0 %v1292, 114
        %v1342 = vpop.permute.xlu0 %1341
        %1343 = vrot.lane.b32.xlu0 %v1293, 114
        %v1344 = vpop.permute.xlu0 %1343
        %1345 = vrot.lane.b32.xlu0 %v1294, 114
        %v1346 = vpop.permute.xlu0 %1345
        %1347 = vrot.lane.b32.xlu0 %v1295, 114
        %v1348 = vpop.permute.xlu0 %1347
        %1349 = vrot.lane.b32.xlu0 %v1296, 114
        %v1350 = vpop.permute.xlu0 %1349
        %1351 = vrot.lane.b32.xlu0 %v1297, 114
        %v1352 = vpop.permute.xlu0 %1351
        %1353 = vrot.lane.b32.xlu0 %v1298, 114
        %v1354 = vpop.permute.xlu0 %1353
        %1355 = vrot.lane.b32.xlu0 %v1299, 114
        %v1356 = vpop.permute.xlu0 %1355
        %1357 = vrot.lane.b32.xlu0 %v1300, 114
        %v1358 = vpop.permute.xlu0 %1357
        %1359 = vrot.lane.b32.xlu0 %v1301, 114
        %v1360 = vpop.permute.xlu0 %1359
        %1361 = vrot.lane.b32.xlu0 %v1302, 114
        %v1362 = vpop.permute.xlu0 %1361
        %1363 = vrot.lane.b32.xlu0 %v1303, 114
        %v1364 = vpop.permute.xlu0 %1363
        %1365 = vrot.lane.b32.xlu0 %v1304, 114
        %v1366 = vpop.permute.xlu0 %1365
        %1367 = vrot.lane.b32.xlu0 %v1305, 114
        %v1368 = vpop.permute.xlu0 %1367
        %1369 = vrot.lane.b32.xlu0 %v1306, 114
        %v1370 = vpop.permute.xlu0 %1369
        %1371 = vrot.lane.b32.xlu0 %v1307, 114
        %v1372 = vpop.permute.xlu0 %1371
        %1373 = vrot.lane.b32.xlu0 %v1308, 114
        %v1374 = vpop.permute.xlu0 %1373
        %1375 = vrot.lane.b32.xlu0 %v1309, 114
        %v1376 = vpop.permute.xlu0 %1375
        %1377 = vrot.lane.b32.xlu0 %v1310, 114
        %v1378 = vpop.permute.xlu0 %1377
        %1379 = vrot.lane.b32.xlu0 %v1311, 114
        %v1380 = vpop.permute.xlu0 %1379
        %1381 = vrot.lane.b32.xlu0 %v1312, 114
        %v1382 = vpop.permute.xlu0 %1381
        %1383 = vrot.lane.b32.xlu0 %v1313, 114
        %v1384 = vpop.permute.xlu0 %1383
        %1385 = vrot.lane.b32.xlu0 %v1314, 114
        %v1386 = vpop.permute.xlu0 %1385
        %v1387 = vsel %vm993, %v1340, %v1342
        %v1388 = vsel %vm993, %v1342, %v1344
        %v1389 = vsel %vm993, %v1346, %v1348
        %v1390 = vsel %vm993, %v1348, %v1350
        %v1391 = vsel %vm993, %v1352, %v1354
        %v1392 = vsel %vm993, %v1354, %v1356
        %v1393 = vsel %vm993, %v1358, %v1360
        %v1394 = vsel %vm993, %v1360, %v1362
        %v1395 = vsel %vm993, %v1364, %v1366
        %v1396 = vsel %vm993, %v1366, %v1368
        %v1397 = vsel %vm993, %v1370, %v1372
        %v1398 = vsel %vm993, %v1372, %v1374
        %v1399 = vsel %vm993, %v1376, %v1378
        %v1400 = vsel %vm993, %v1378, %v1380
        %v1401 = vsel %vm993, %v1382, %v1384
        %v1402 = vsel %vm993, %v1384, %v1386
        %v1427 = vadd.f32 %v1235, %v1387
        %v1428 = vadd.f32 %v1236, %v1388
        %v1429 = vadd.f32 %v1237, %v1344
        %v1430 = vadd.f32 %v1238, %v1389
        %v1431 = vadd.f32 %v1239, %v1390
        %v1432 = vadd.f32 %v1240, %v1350
        %v1433 = vadd.f32 %v1241, %v1391
        %v1434 = vadd.f32 %v1242, %v1392
        %v1435 = vadd.f32 %v1243, %v1356
        %v1436 = vadd.f32 %v1244, %v1393
        %v1437 = vadd.f32 %v1245, %v1394
        %v1438 = vadd.f32 %v1246, %v1362
        %v1439 = vadd.f32 %v1247, %v1395
        %v1440 = vadd.f32 %v1248, %v1396
        %v1441 = vadd.f32 %v1249, %v1368
        %v1442 = vadd.f32 %v1250, %v1397
        %v1443 = vadd.f32 %v1251, %v1398
        %v1444 = vadd.f32 %v1252, %v1374
        %v1445 = vadd.f32 %v1253, %v1399
        %v1446 = vadd.f32 %v1254, %v1400
        %v1447 = vadd.f32 %v1255, %v1380
        %v1448 = vadd.f32 %v1256, %v1401
        %v1449 = vadd.f32 %v1257, %v1402
        %v1450 = vadd.f32 %v1258, %v1386
        %1451 = vset.pattern.permute.xlu0 6
        %1452 = vperm.xlu0 %1451, %v825
        %v1453 = vpop.permute.xlu0 %1452
        %1455 = vset.pattern.permute.xlu0 6
        %1456 = vperm.xlu0 %1455, %v826
        %v1457 = vpop.permute.xlu0 %1456
        %1459 = vset.pattern.permute.xlu0 6
        %1460 = vperm.xlu0 %1459, %v827
        %v1461 = vpop.permute.xlu0 %1460
        %1463 = vset.pattern.permute.xlu0 6
        %1464 = vperm.xlu0 %1463, %v828
        %v1465 = vpop.permute.xlu0 %1464
        %1467 = vset.pattern.permute.xlu0 6
        %1468 = vperm.xlu0 %1467, %v829
        %v1469 = vpop.permute.xlu0 %1468
        %1471 = vset.pattern.permute.xlu0 6
        %1472 = vperm.xlu0 %1471, %v830
        %v1473 = vpop.permute.xlu0 %1472
        %1475 = vset.pattern.permute.xlu0 6
        %1476 = vperm.xlu0 %1475, %v831
        %v1477 = vpop.permute.xlu0 %1476
        %1479 = vset.pattern.permute.xlu0 6
        %1480 = vperm.xlu0 %1479, %v832
        %v1481 = vpop.permute.xlu0 %1480
        %v1483 = vmul.f32 %v801, %v1453
        %v1484 = vmul.f32 %v802, %v1453
        %v1485 = vmul.f32 %v804, %v1457
        %v1486 = vmul.f32 %v805, %v1457
        %v1487 = vmul.f32 %v807, %v1461
        %v1488 = vmul.f32 %v808, %v1461
        %v1489 = vmul.f32 %v810, %v1465
        %v1490 = vmul.f32 %v811, %v1465
        %v1491 = vmul.f32 %v813, %v1469
        %v1492 = vmul.f32 %v814, %v1469
        %v1493 = vmul.f32 %v816, %v1473
        %v1494 = vmul.f32 %v817, %v1473
        %v1495 = vmul.f32 %v819, %v1477
        %v1496 = vmul.f32 %v820, %v1477
        %v1497 = vmul.f32 %v822, %v1481
        %v1498 = vmul.f32 %v823, %v1481
        %1515 = vrot.lane.b32.xlu0 %v1483, 100
        %v1516 = vpop.permute.xlu0 %1515
        %1517 = vrot.lane.b32.xlu0 %v1484, 100
        %v1518 = vpop.permute.xlu0 %1517
        %1519 = vrot.lane.b32.xlu0 %v1485, 100
        %v1520 = vpop.permute.xlu0 %1519
        %1521 = vrot.lane.b32.xlu0 %v1486, 100
        %v1522 = vpop.permute.xlu0 %1521
        %1523 = vrot.lane.b32.xlu0 %v1487, 100
        %v1524 = vpop.permute.xlu0 %1523
        %1525 = vrot.lane.b32.xlu0 %v1488, 100
        %v1526 = vpop.permute.xlu0 %1525
        %1527 = vrot.lane.b32.xlu0 %v1489, 100
        %v1528 = vpop.permute.xlu0 %1527
        %1529 = vrot.lane.b32.xlu0 %v1490, 100
        %v1530 = vpop.permute.xlu0 %1529
        %1531 = vrot.lane.b32.xlu0 %v1491, 100
        %v1532 = vpop.permute.xlu0 %1531
        %1533 = vrot.lane.b32.xlu0 %v1492, 100
        %v1534 = vpop.permute.xlu0 %1533
        %1535 = vrot.lane.b32.xlu0 %v1493, 100
        %v1536 = vpop.permute.xlu0 %1535
        %1537 = vrot.lane.b32.xlu0 %v1494, 100
        %v1538 = vpop.permute.xlu0 %1537
        %1539 = vrot.lane.b32.xlu0 %v1495, 100
        %v1540 = vpop.permute.xlu0 %1539
        %1541 = vrot.lane.b32.xlu0 %v1496, 100
        %v1542 = vpop.permute.xlu0 %1541
        %1543 = vrot.lane.b32.xlu0 %v1497, 100
        %v1544 = vpop.permute.xlu0 %1543
        %1545 = vrot.lane.b32.xlu0 %v1498, 100
        %v1546 = vpop.permute.xlu0 %1545
        %v1547 = vsel %vm1146, %v1516, %v1518
        %v1548 = vsel %vm1146, %v1520, %v1522
        %v1549 = vsel %vm1146, %v1524, %v1526
        %v1550 = vsel %vm1146, %v1528, %v1530
        %v1551 = vsel %vm1146, %v1532, %v1534
        %v1552 = vsel %vm1146, %v1536, %v1538
        %v1553 = vsel %vm1146, %v1540, %v1542
        %v1554 = vsel %vm1146, %v1544, %v1546
        %v1579 = vadd.f32 %v1427, %v1516
        %v1580 = vadd.f32 %v1428, %v1547
        %v1581 = vadd.f32 %v1429, %v1518
        %v1582 = vadd.f32 %v1430, %v1520
        %v1583 = vadd.f32 %v1431, %v1548
        %v1584 = vadd.f32 %v1432, %v1522
        %v1585 = vadd.f32 %v1433, %v1524
        %v1586 = vadd.f32 %v1434, %v1549
        %v1587 = vadd.f32 %v1435, %v1526
        %v1588 = vadd.f32 %v1436, %v1528
        %v1589 = vadd.f32 %v1437, %v1550
        %v1590 = vadd.f32 %v1438, %v1530
        %v1591 = vadd.f32 %v1439, %v1532
        %v1592 = vadd.f32 %v1440, %v1551
        %v1593 = vadd.f32 %v1441, %v1534
        %v1594 = vadd.f32 %v1442, %v1536
        %v1595 = vadd.f32 %v1443, %v1552
        %v1596 = vadd.f32 %v1444, %v1538
        %v1597 = vadd.f32 %v1445, %v1540
        %v1598 = vadd.f32 %v1446, %v1553
        %v1599 = vadd.f32 %v1447, %v1542
        %v1600 = vadd.f32 %v1448, %v1544
        %v1601 = vadd.f32 %v1449, %v1554
        %v1602 = vadd.f32 %v1450, %v1546
        %v1603 = vsel %vm784, 1, 0
        %v1604 = vsel %vm785, 1, 0
        %vm1605 = vcmp.eq.s32.totalorder %v1603, 1
        %vm1606 = vcmp.eq.s32.totalorder %v1604, 1
        %1631 = vrot.lane.b32.xlu0 %v1579, 15
        %v1632 = vpop.permute.xlu0 %1631
        %1633 = vrot.lane.b32.xlu0 %v1580, 15
        %v1634 = vpop.permute.xlu0 %1633
        %1635 = vrot.lane.b32.xlu0 %v1581, 15
        %v1636 = vpop.permute.xlu0 %1635
        %1637 = vrot.lane.b32.xlu0 %v1582, 15
        %v1638 = vpop.permute.xlu0 %1637
        %1639 = vrot.lane.b32.xlu0 %v1583, 15
        %v1640 = vpop.permute.xlu0 %1639
        %1641 = vrot.lane.b32.xlu0 %v1584, 15
        %v1642 = vpop.permute.xlu0 %1641
        %1643 = vrot.lane.b32.xlu0 %v1585, 15
        %v1644 = vpop.permute.xlu0 %1643
        %1645 = vrot.lane.b32.xlu0 %v1586, 15
        %v1646 = vpop.permute.xlu0 %1645
        %1647 = vrot.lane.b32.xlu0 %v1587, 15
        %v1648 = vpop.permute.xlu0 %1647
        %1649 = vrot.lane.b32.xlu0 %v1588, 15
        %v1650 = vpop.permute.xlu0 %1649
        %1651 = vrot.lane.b32.xlu0 %v1589, 15
        %v1652 = vpop.permute.xlu0 %1651
        %1653 = vrot.lane.b32.xlu0 %v1590, 15
        %v1654 = vpop.permute.xlu0 %1653
        %1655 = vrot.lane.b32.xlu0 %v1591, 15
        %v1656 = vpop.permute.xlu0 %1655
        %1657 = vrot.lane.b32.xlu0 %v1592, 15
        %v1658 = vpop.permute.xlu0 %1657
        %1659 = vrot.lane.b32.xlu0 %v1593, 15
        %v1660 = vpop.permute.xlu0 %1659
        %1661 = vrot.lane.b32.xlu0 %v1594, 15
        %v1662 = vpop.permute.xlu0 %1661
        %1663 = vrot.lane.b32.xlu0 %v1595, 15
        %v1664 = vpop.permute.xlu0 %1663
        %1665 = vrot.lane.b32.xlu0 %v1596, 15
        %v1666 = vpop.permute.xlu0 %1665
        %1667 = vrot.lane.b32.xlu0 %v1597, 15
        %v1668 = vpop.permute.xlu0 %1667
        %1669 = vrot.lane.b32.xlu0 %v1598, 15
        %v1670 = vpop.permute.xlu0 %1669
        %1671 = vrot.lane.b32.xlu0 %v1599, 15
        %v1672 = vpop.permute.xlu0 %1671
        %1673 = vrot.lane.b32.xlu0 %v1600, 15
        %v1674 = vpop.permute.xlu0 %1673
        %1675 = vrot.lane.b32.xlu0 %v1601, 15
        %v1676 = vpop.permute.xlu0 %1675
        %1677 = vrot.lane.b32.xlu0 %v1602, 15
        %v1678 = vpop.permute.xlu0 %1677
        %vm1679 = vcmask 121856
        %v1680 = vsel %vm1679, %v1632, %v1634
        %v1681 = vsel %vm1679, %v1634, %v1636
        %v1682 = vsel %vm1679, %v1638, %v1640
        %v1683 = vsel %vm1679, %v1640, %v1642
        %v1684 = vsel %vm1679, %v1644, %v1646
        %v1685 = vsel %vm1679, %v1646, %v1648
        %v1686 = vsel %vm1679, %v1650, %v1652
        %v1687 = vsel %vm1679, %v1652, %v1654
        %v1688 = vsel %vm1679, %v1656, %v1658
        %v1689 = vsel %vm1679, %v1658, %v1660
        %v1690 = vsel %vm1679, %v1662, %v1664
        %v1691 = vsel %vm1679, %v1664, %v1666
        %v1692 = vsel %vm1679, %v1668, %v1670
        %v1693 = vsel %vm1679, %v1670, %v1672
        %v1694 = vsel %vm1679, %v1674, %v1676
        %v1695 = vsel %vm1679, %v1676, %v1678
        %v1712 = vsel %vm1605, %v1680, 0.0
        %v1713 = vsel %vm1606, %v1681, 0.0
        %v1714 = vsel %vm1605, %v1682, 0.0
        %v1715 = vsel %vm1606, %v1683, 0.0
        %v1716 = vsel %vm1605, %v1684, 0.0
        %v1717 = vsel %vm1606, %v1685, 0.0
        %v1718 = vsel %vm1605, %v1686, 0.0
        %v1719 = vsel %vm1606, %v1687, 0.0
        %v1720 = vsel %vm1605, %v1688, 0.0
        %v1721 = vsel %vm1606, %v1689, 0.0
        %v1722 = vsel %vm1605, %v1690, 0.0
        %v1723 = vsel %vm1606, %v1691, 0.0
        %v1724 = vsel %vm1605, %v1692, 0.0
        %v1725 = vsel %vm1606, %v1693, 0.0
        %v1726 = vsel %vm1605, %v1694, 0.0
        %v1727 = vsel %vm1606, %v1695, 0.0
        %1744 = vrot.lane.b32.xlu0 %v1712, 114
        %v1745 = vpop.permute.xlu0 %1744
        %1746 = vrot.lane.b32.xlu0 %v1713, 114
        %v1747 = vpop.permute.xlu0 %1746
        %1748 = vrot.lane.b32.xlu0 %v1714, 114
        %v1749 = vpop.permute.xlu0 %1748
        %1750 = vrot.lane.b32.xlu0 %v1715, 114
        %v1751 = vpop.permute.xlu0 %1750
        %1752 = vrot.lane.b32.xlu0 %v1716, 114
        %v1753 = vpop.permute.xlu0 %1752
        %1754 = vrot.lane.b32.xlu0 %v1717, 114
        %v1755 = vpop.permute.xlu0 %1754
        %1756 = vrot.lane.b32.xlu0 %v1718, 114
        %v1757 = vpop.permute.xlu0 %1756
        %1758 = vrot.lane.b32.xlu0 %v1719, 114
        %v1759 = vpop.permute.xlu0 %1758
        %1760 = vrot.lane.b32.xlu0 %v1720, 114
        %v1761 = vpop.permute.xlu0 %1760
        %1762 = vrot.lane.b32.xlu0 %v1721, 114
        %v1763 = vpop.permute.xlu0 %1762
        %1764 = vrot.lane.b32.xlu0 %v1722, 114
        %v1765 = vpop.permute.xlu0 %1764
        %1766 = vrot.lane.b32.xlu0 %v1723, 114
        %v1767 = vpop.permute.xlu0 %1766
        %1768 = vrot.lane.b32.xlu0 %v1724, 114
        %v1769 = vpop.permute.xlu0 %1768
        %1770 = vrot.lane.b32.xlu0 %v1725, 114
        %v1771 = vpop.permute.xlu0 %1770
        %1772 = vrot.lane.b32.xlu0 %v1726, 114
        %v1773 = vpop.permute.xlu0 %1772
        %1774 = vrot.lane.b32.xlu0 %v1727, 114
        %v1775 = vpop.permute.xlu0 %1774
        %v1776 = vsel %vm993, %v1745, %v1747
        %v1777 = vsel %vm993, %v1749, %v1751
        %v1778 = vsel %vm993, %v1753, %v1755
        %v1779 = vsel %vm993, %v1757, %v1759
        %v1780 = vsel %vm993, %v1761, %v1763
        %v1781 = vsel %vm993, %v1765, %v1767
        %v1782 = vsel %vm993, %v1769, %v1771
        %v1783 = vsel %vm993, %v1773, %v1775
        %v1808 = vadd.f32 %v1179, %v1745
        %v1809 = vadd.f32 %v1180, %v1776
        %v1810 = vadd.f32 %v1181, %v1747
        %v1811 = vadd.f32 %v1182, %v1749
        %v1812 = vadd.f32 %v1183, %v1777
        %v1813 = vadd.f32 %v1184, %v1751
        %v1814 = vadd.f32 %v1185, %v1753
        %v1815 = vadd.f32 %v1186, %v1778
        %v1816 = vadd.f32 %v1187, %v1755
        %v1817 = vadd.f32 %v1188, %v1757
        %v1818 = vadd.f32 %v1189, %v1779
        %v1819 = vadd.f32 %v1190, %v1759
        %v1820 = vadd.f32 %v1191, %v1761
        %v1821 = vadd.f32 %v1192, %v1780
        %v1822 = vadd.f32 %v1193, %v1763
        %v1823 = vadd.f32 %v1194, %v1765
        %v1824 = vadd.f32 %v1195, %v1781
        %v1825 = vadd.f32 %v1196, %v1767
        %v1826 = vadd.f32 %v1197, %v1769
        %v1827 = vadd.f32 %v1198, %v1782
        %v1828 = vadd.f32 %v1199, %v1771
        %v1829 = vadd.f32 %v1200, %v1773
        %v1830 = vadd.f32 %v1201, %v1783
        %v1831 = vadd.f32 %v1202, %v1775
        %1832 = vset.pattern.permute.xlu0 2
        %1833 = vperm.xlu0 %1832, %v825
        %v1834 = vpop.permute.xlu0 %1833
        %1836 = vset.pattern.permute.xlu0 2
        %1837 = vperm.xlu0 %1836, %v826
        %v1838 = vpop.permute.xlu0 %1837
        %1840 = vset.pattern.permute.xlu0 2
        %1841 = vperm.xlu0 %1840, %v827
        %v1842 = vpop.permute.xlu0 %1841
        %1844 = vset.pattern.permute.xlu0 2
        %1845 = vperm.xlu0 %1844, %v828
        %v1846 = vpop.permute.xlu0 %1845
        %1848 = vset.pattern.permute.xlu0 2
        %1849 = vperm.xlu0 %1848, %v829
        %v1850 = vpop.permute.xlu0 %1849
        %1852 = vset.pattern.permute.xlu0 2
        %1853 = vperm.xlu0 %1852, %v830
        %v1854 = vpop.permute.xlu0 %1853
        %1856 = vset.pattern.permute.xlu0 2
        %1857 = vperm.xlu0 %1856, %v831
        %v1858 = vpop.permute.xlu0 %1857
        %1860 = vset.pattern.permute.xlu0 2
        %1861 = vperm.xlu0 %1860, %v832
        %v1862 = vpop.permute.xlu0 %1861
        %v1864 = vmul.f32 %v800, %v1834
        %v1865 = vmul.f32 %v801, %v1834
        %v1866 = vmul.f32 %v802, %v1834
        %v1867 = vmul.f32 %v803, %v1838
        %v1868 = vmul.f32 %v804, %v1838
        %v1869 = vmul.f32 %v805, %v1838
        %v1870 = vmul.f32 %v806, %v1842
        %v1871 = vmul.f32 %v807, %v1842
        %v1872 = vmul.f32 %v808, %v1842
        %v1873 = vmul.f32 %v809, %v1846
        %v1874 = vmul.f32 %v810, %v1846
        %v1875 = vmul.f32 %v811, %v1846
        %v1876 = vmul.f32 %v812, %v1850
        %v1877 = vmul.f32 %v813, %v1850
        %v1878 = vmul.f32 %v814, %v1850
        %v1879 = vmul.f32 %v815, %v1854
        %v1880 = vmul.f32 %v816, %v1854
        %v1881 = vmul.f32 %v817, %v1854
        %v1882 = vmul.f32 %v818, %v1858
        %v1883 = vmul.f32 %v819, %v1858
        %v1884 = vmul.f32 %v820, %v1858
        %v1885 = vmul.f32 %v821, %v1862
        %v1886 = vmul.f32 %v822, %v1862
        %v1887 = vmul.f32 %v823, %v1862
        %1888 = vset.pattern.permute.xlu0 5
        %1889 = vperm.xlu0 %1888, %v825
        %v1890 = vpop.permute.xlu0 %1889
        %1892 = vset.pattern.permute.xlu0 5
        %1893 = vperm.xlu0 %1892, %v826
        %v1894 = vpop.permute.xlu0 %1893
        %1896 = vset.pattern.permute.xlu0 5
        %1897 = vperm.xlu0 %1896, %v827
        %v1898 = vpop.permute.xlu0 %1897
        %1900 = vset.pattern.permute.xlu0 5
        %1901 = vperm.xlu0 %1900, %v828
        %v1902 = vpop.permute.xlu0 %1901
        %1904 = vset.pattern.permute.xlu0 5
        %1905 = vperm.xlu0 %1904, %v829
        %v1906 = vpop.permute.xlu0 %1905
        %1908 = vset.pattern.permute.xlu0 5
        %1909 = vperm.xlu0 %1908, %v830
        %v1910 = vpop.permute.xlu0 %1909
        %1912 = vset.pattern.permute.xlu0 5
        %1913 = vperm.xlu0 %1912, %v831
        %v1914 = vpop.permute.xlu0 %1913
        %1916 = vset.pattern.permute.xlu0 5
        %1917 = vperm.xlu0 %1916, %v832
        %v1918 = vpop.permute.xlu0 %1917
        %v1920 = vmul.f32 %v801, %v1890
        %v1921 = vmul.f32 %v802, %v1890
        %v1922 = vmul.f32 %v804, %v1894
        %v1923 = vmul.f32 %v805, %v1894
        %v1924 = vmul.f32 %v807, %v1898
        %v1925 = vmul.f32 %v808, %v1898
        %v1926 = vmul.f32 %v810, %v1902
        %v1927 = vmul.f32 %v811, %v1902
        %v1928 = vmul.f32 %v813, %v1906
        %v1929 = vmul.f32 %v814, %v1906
        %v1930 = vmul.f32 %v816, %v1910
        %v1931 = vmul.f32 %v817, %v1910
        %v1932 = vmul.f32 %v819, %v1914
        %v1933 = vmul.f32 %v820, %v1914
        %v1934 = vmul.f32 %v822, %v1918
        %v1935 = vmul.f32 %v823, %v1918
        %1952 = vrot.lane.b32.xlu0 %v1920, 114
        %v1953 = vpop.permute.xlu0 %1952
        %1954 = vrot.lane.b32.xlu0 %v1921, 114
        %v1955 = vpop.permute.xlu0 %1954
        %1956 = vrot.lane.b32.xlu0 %v1922, 114
        %v1957 = vpop.permute.xlu0 %1956
        %1958 = vrot.lane.b32.xlu0 %v1923, 114
        %v1959 = vpop.permute.xlu0 %1958
        %1960 = vrot.lane.b32.xlu0 %v1924, 114
        %v1961 = vpop.permute.xlu0 %1960
        %1962 = vrot.lane.b32.xlu0 %v1925, 114
        %v1963 = vpop.permute.xlu0 %1962
        %1964 = vrot.lane.b32.xlu0 %v1926, 114
        %v1965 = vpop.permute.xlu0 %1964
        %1966 = vrot.lane.b32.xlu0 %v1927, 114
        %v1967 = vpop.permute.xlu0 %1966
        %1968 = vrot.lane.b32.xlu0 %v1928, 114
        %v1969 = vpop.permute.xlu0 %1968
        %1970 = vrot.lane.b32.xlu0 %v1929, 114
        %v1971 = vpop.permute.xlu0 %1970
        %1972 = vrot.lane.b32.xlu0 %v1930, 114
        %v1973 = vpop.permute.xlu0 %1972
        %1974 = vrot.lane.b32.xlu0 %v1931, 114
        %v1975 = vpop.permute.xlu0 %1974
        %1976 = vrot.lane.b32.xlu0 %v1932, 114
        %v1977 = vpop.permute.xlu0 %1976
        %1978 = vrot.lane.b32.xlu0 %v1933, 114
        %v1979 = vpop.permute.xlu0 %1978
        %1980 = vrot.lane.b32.xlu0 %v1934, 114
        %v1981 = vpop.permute.xlu0 %1980
        %1982 = vrot.lane.b32.xlu0 %v1935, 114
        %v1983 = vpop.permute.xlu0 %1982
        %v1984 = vsel %vm993, %v1953, %v1955
        %v1985 = vsel %vm993, %v1957, %v1959
        %v1986 = vsel %vm993, %v1961, %v1963
        %v1987 = vsel %vm993, %v1965, %v1967
        %v1988 = vsel %vm993, %v1969, %v1971
        %v1989 = vsel %vm993, %v1973, %v1975
        %v1990 = vsel %vm993, %v1977, %v1979
        %v1991 = vsel %vm993, %v1981, %v1983
        %v2016 = vadd.f32 %v1864, %v1953
        %v2017 = vadd.f32 %v1865, %v1984
        %v2018 = vadd.f32 %v1866, %v1955
        %v2019 = vadd.f32 %v1867, %v1957
        %v2020 = vadd.f32 %v1868, %v1985
        %v2021 = vadd.f32 %v1869, %v1959
        %v2022 = vadd.f32 %v1870, %v1961
        %v2023 = vadd.f32 %v1871, %v1986
        %v2024 = vadd.f32 %v1872, %v1963
        %v2025 = vadd.f32 %v1873, %v1965
        %v2026 = vadd.f32 %v1874, %v1987
        %v2027 = vadd.f32 %v1875, %v1967
        %v2028 = vadd.f32 %v1876, %v1969
        %v2029 = vadd.f32 %v1877, %v1988
        %v2030 = vadd.f32 %v1878, %v1971
        %v2031 = vadd.f32 %v1879, %v1973
        %v2032 = vadd.f32 %v1880, %v1989
        %v2033 = vadd.f32 %v1881, %v1975
        %v2034 = vadd.f32 %v1882, %v1977
        %v2035 = vadd.f32 %v1883, %v1990
        %v2036 = vadd.f32 %v1884, %v1979
        %v2037 = vadd.f32 %v1885, %v1981
        %v2038 = vadd.f32 %v1886, %v1991
        %v2039 = vadd.f32 %v1887, %v1983
        %2040 = vset.pattern.permute.xlu0 8
        %2041 = vperm.xlu0 %2040, %v825
        %v2042 = vpop.permute.xlu0 %2041
        %2044 = vset.pattern.permute.xlu0 8
        %2045 = vperm.xlu0 %2044, %v826
        %v2046 = vpop.permute.xlu0 %2045
        %2048 = vset.pattern.permute.xlu0 8
        %2049 = vperm.xlu0 %2048, %v827
        %v2050 = vpop.permute.xlu0 %2049
        %2052 = vset.pattern.permute.xlu0 8
        %2053 = vperm.xlu0 %2052, %v828
        %v2054 = vpop.permute.xlu0 %2053
        %2056 = vset.pattern.permute.xlu0 8
        %2057 = vperm.xlu0 %2056, %v829
        %v2058 = vpop.permute.xlu0 %2057
        %2060 = vset.pattern.permute.xlu0 8
        %2061 = vperm.xlu0 %2060, %v830
        %v2062 = vpop.permute.xlu0 %2061
        %2064 = vset.pattern.permute.xlu0 8
        %2065 = vperm.xlu0 %2064, %v831
        %v2066 = vpop.permute.xlu0 %2065
        %2068 = vset.pattern.permute.xlu0 8
        %2069 = vperm.xlu0 %2068, %v832
        %v2070 = vpop.permute.xlu0 %2069
        %v2072 = vmul.f32 %v801, %v2042
        %v2073 = vmul.f32 %v802, %v2042
        %v2074 = vmul.f32 %v804, %v2046
        %v2075 = vmul.f32 %v805, %v2046
        %v2076 = vmul.f32 %v807, %v2050
        %v2077 = vmul.f32 %v808, %v2050
        %v2078 = vmul.f32 %v810, %v2054
        %v2079 = vmul.f32 %v811, %v2054
        %v2080 = vmul.f32 %v813, %v2058
        %v2081 = vmul.f32 %v814, %v2058
        %v2082 = vmul.f32 %v816, %v2062
        %v2083 = vmul.f32 %v817, %v2062
        %v2084 = vmul.f32 %v819, %v2066
        %v2085 = vmul.f32 %v820, %v2066
        %v2086 = vmul.f32 %v822, %v2070
        %v2087 = vmul.f32 %v823, %v2070
        %2104 = vrot.lane.b32.xlu0 %v2072, 100
        %v2105 = vpop.permute.xlu0 %2104
        %2106 = vrot.lane.b32.xlu0 %v2073, 100
        %v2107 = vpop.permute.xlu0 %2106
        %2108 = vrot.lane.b32.xlu0 %v2074, 100
        %v2109 = vpop.permute.xlu0 %2108
        %2110 = vrot.lane.b32.xlu0 %v2075, 100
        %v2111 = vpop.permute.xlu0 %2110
        %2112 = vrot.lane.b32.xlu0 %v2076, 100
        %v2113 = vpop.permute.xlu0 %2112
        %2114 = vrot.lane.b32.xlu0 %v2077, 100
        %v2115 = vpop.permute.xlu0 %2114
        %2116 = vrot.lane.b32.xlu0 %v2078, 100
        %v2117 = vpop.permute.xlu0 %2116
        %2118 = vrot.lane.b32.xlu0 %v2079, 100
        %v2119 = vpop.permute.xlu0 %2118
        %2120 = vrot.lane.b32.xlu0 %v2080, 100
        %v2121 = vpop.permute.xlu0 %2120
        %2122 = vrot.lane.b32.xlu0 %v2081, 100
        %v2123 = vpop.permute.xlu0 %2122
        %2124 = vrot.lane.b32.xlu0 %v2082, 100
        %v2125 = vpop.permute.xlu0 %2124
        %2126 = vrot.lane.b32.xlu0 %v2083, 100
        %v2127 = vpop.permute.xlu0 %2126
        %2128 = vrot.lane.b32.xlu0 %v2084, 100
        %v2129 = vpop.permute.xlu0 %2128
        %2130 = vrot.lane.b32.xlu0 %v2085, 100
        %v2131 = vpop.permute.xlu0 %2130
        %2132 = vrot.lane.b32.xlu0 %v2086, 100
        %v2133 = vpop.permute.xlu0 %2132
        %2134 = vrot.lane.b32.xlu0 %v2087, 100
        %v2135 = vpop.permute.xlu0 %2134
        %v2136 = vsel %vm1146, %v2105, %v2107
        %v2137 = vsel %vm1146, %v2109, %v2111
        %v2138 = vsel %vm1146, %v2113, %v2115
        %v2139 = vsel %vm1146, %v2117, %v2119
        %v2140 = vsel %vm1146, %v2121, %v2123
        %v2141 = vsel %vm1146, %v2125, %v2127
        %v2142 = vsel %vm1146, %v2129, %v2131
        %v2143 = vsel %vm1146, %v2133, %v2135
        %v2168 = vadd.f32 %v2016, %v2105
        %v2169 = vadd.f32 %v2017, %v2136
        %v2170 = vadd.f32 %v2018, %v2107
        %v2171 = vadd.f32 %v2019, %v2109
        %v2172 = vadd.f32 %v2020, %v2137
        %v2173 = vadd.f32 %v2021, %v2111
        %v2174 = vadd.f32 %v2022, %v2113
        %v2175 = vadd.f32 %v2023, %v2138
        %v2176 = vadd.f32 %v2024, %v2115
        %v2177 = vadd.f32 %v2025, %v2117
        %v2178 = vadd.f32 %v2026, %v2139
        %v2179 = vadd.f32 %v2027, %v2119
        %v2180 = vadd.f32 %v2028, %v2121
        %v2181 = vadd.f32 %v2029, %v2140
        %v2182 = vadd.f32 %v2030, %v2123
        %v2183 = vadd.f32 %v2031, %v2125
        %v2184 = vadd.f32 %v2032, %v2141
        %v2185 = vadd.f32 %v2033, %v2127
        %v2186 = vadd.f32 %v2034, %v2129
        %v2187 = vadd.f32 %v2035, %v2142
        %v2188 = vadd.f32 %v2036, %v2131
        %v2189 = vadd.f32 %v2037, %v2133
        %v2190 = vadd.f32 %v2038, %v2143
        %v2191 = vadd.f32 %v2039, %v2135
        %v2192 = vsel %vm786, 1, 0
        %v2193 = vsel %vm787, 1, 0
        %vm2194 = vcmp.eq.s32.totalorder %v2192, 1
        %vm2195 = vcmp.eq.s32.totalorder %v2193, 1
        %2220 = vrot.lane.b32.xlu0 %v2168, 13
        %v2221 = vpop.permute.xlu0 %2220
        %2222 = vrot.lane.b32.xlu0 %v2169, 13
        %v2223 = vpop.permute.xlu0 %2222
        %2224 = vrot.lane.b32.xlu0 %v2170, 13
        %v2225 = vpop.permute.xlu0 %2224
        %2226 = vrot.lane.b32.xlu0 %v2171, 13
        %v2227 = vpop.permute.xlu0 %2226
        %2228 = vrot.lane.b32.xlu0 %v2172, 13
        %v2229 = vpop.permute.xlu0 %2228
        %2230 = vrot.lane.b32.xlu0 %v2173, 13
        %v2231 = vpop.permute.xlu0 %2230
        %2232 = vrot.lane.b32.xlu0 %v2174, 13
        %v2233 = vpop.permute.xlu0 %2232
        %2234 = vrot.lane.b32.xlu0 %v2175, 13
        %v2235 = vpop.permute.xlu0 %2234
        %2236 = vrot.lane.b32.xlu0 %v2176, 13
        %v2237 = vpop.permute.xlu0 %2236
        %2238 = vrot.lane.b32.xlu0 %v2177, 13
        %v2239 = vpop.permute.xlu0 %2238
        %2240 = vrot.lane.b32.xlu0 %v2178, 13
        %v2241 = vpop.permute.xlu0 %2240
        %2242 = vrot.lane.b32.xlu0 %v2179, 13
        %v2243 = vpop.permute.xlu0 %2242
        %2244 = vrot.lane.b32.xlu0 %v2180, 13
        %v2245 = vpop.permute.xlu0 %2244
        %2246 = vrot.lane.b32.xlu0 %v2181, 13
        %v2247 = vpop.permute.xlu0 %2246
        %2248 = vrot.lane.b32.xlu0 %v2182, 13
        %v2249 = vpop.permute.xlu0 %2248
        %2250 = vrot.lane.b32.xlu0 %v2183, 13
        %v2251 = vpop.permute.xlu0 %2250
        %2252 = vrot.lane.b32.xlu0 %v2184, 13
        %v2253 = vpop.permute.xlu0 %2252
        %2254 = vrot.lane.b32.xlu0 %v2185, 13
        %v2255 = vpop.permute.xlu0 %2254
        %2256 = vrot.lane.b32.xlu0 %v2186, 13
        %v2257 = vpop.permute.xlu0 %2256
        %2258 = vrot.lane.b32.xlu0 %v2187, 13
        %v2259 = vpop.permute.xlu0 %2258
        %2260 = vrot.lane.b32.xlu0 %v2188, 13
        %v2261 = vpop.permute.xlu0 %2260
        %2262 = vrot.lane.b32.xlu0 %v2189, 13
        %v2263 = vpop.permute.xlu0 %2262
        %2264 = vrot.lane.b32.xlu0 %v2190, 13
        %v2265 = vpop.permute.xlu0 %2264
        %2266 = vrot.lane.b32.xlu0 %v2191, 13
        %v2267 = vpop.permute.xlu0 %2266
        %vm2268 = vcmask 105472
        %v2269 = vsel %vm2268, %v2221, %v2223
        %v2270 = vsel %vm2268, %v2223, %v2225
        %v2271 = vsel %vm2268, %v2227, %v2229
        %v2272 = vsel %vm2268, %v2229, %v2231
        %v2273 = vsel %vm2268, %v2233, %v2235
        %v2274 = vsel %vm2268, %v2235, %v2237
        %v2275 = vsel %vm2268, %v2239, %v2241
        %v2276 = vsel %vm2268, %v2241, %v2243
        %v2277 = vsel %vm2268, %v2245, %v2247
        %v2278 = vsel %vm2268, %v2247, %v2249
        %v2279 = vsel %vm2268, %v2251, %v2253
        %v2280 = vsel %vm2268, %v2253, %v2255
        %v2281 = vsel %vm2268, %v2257, %v2259
        %v2282 = vsel %vm2268, %v2259, %v2261
        %v2283 = vsel %vm2268, %v2263, %v2265
        %v2284 = vsel %vm2268, %v2265, %v2267
        %v2301 = vsel %vm2194, %v2269, 0.0
        %v2302 = vsel %vm2195, %v2270, 0.0
        %v2303 = vsel %vm2194, %v2271, 0.0
        %v2304 = vsel %vm2195, %v2272, 0.0
        %v2305 = vsel %vm2194, %v2273, 0.0
        %v2306 = vsel %vm2195, %v2274, 0.0
        %v2307 = vsel %vm2194, %v2275, 0.0
        %v2308 = vsel %vm2195, %v2276, 0.0
        %v2309 = vsel %vm2194, %v2277, 0.0
        %v2310 = vsel %vm2195, %v2278, 0.0
        %v2311 = vsel %vm2194, %v2279, 0.0
        %v2312 = vsel %vm2195, %v2280, 0.0
        %v2313 = vsel %vm2194, %v2281, 0.0
        %v2314 = vsel %vm2195, %v2282, 0.0
        %v2315 = vsel %vm2194, %v2283, 0.0
        %v2316 = vsel %vm2195, %v2284, 0.0
        %2333 = vrot.lane.b32.xlu0 %v2301, 114
        %v2334 = vpop.permute.xlu0 %2333
        %2335 = vrot.lane.b32.xlu0 %v2302, 114
        %v2336 = vpop.permute.xlu0 %2335
        %2337 = vrot.lane.b32.xlu0 %v2303, 114
        %v2338 = vpop.permute.xlu0 %2337
        %2339 = vrot.lane.b32.xlu0 %v2304, 114
        %v2340 = vpop.permute.xlu0 %2339
        %2341 = vrot.lane.b32.xlu0 %v2305, 114
        %v2342 = vpop.permute.xlu0 %2341
        %2343 = vrot.lane.b32.xlu0 %v2306, 114
        %v2344 = vpop.permute.xlu0 %2343
        %2345 = vrot.lane.b32.xlu0 %v2307, 114
        %v2346 = vpop.permute.xlu0 %2345
        %2347 = vrot.lane.b32.xlu0 %v2308, 114
        %v2348 = vpop.permute.xlu0 %2347
        %2349 = vrot.lane.b32.xlu0 %v2309, 114
        %v2350 = vpop.permute.xlu0 %2349
        %2351 = vrot.lane.b32.xlu0 %v2310, 114
        %v2352 = vpop.permute.xlu0 %2351
        %2353 = vrot.lane.b32.xlu0 %v2311, 114
        %v2354 = vpop.permute.xlu0 %2353
        %2355 = vrot.lane.b32.xlu0 %v2312, 114
        %v2356 = vpop.permute.xlu0 %2355
        %2357 = vrot.lane.b32.xlu0 %v2313, 114
        %v2358 = vpop.permute.xlu0 %2357
        %2359 = vrot.lane.b32.xlu0 %v2314, 114
        %v2360 = vpop.permute.xlu0 %2359
        %2361 = vrot.lane.b32.xlu0 %v2315, 114
        %v2362 = vpop.permute.xlu0 %2361
        %2363 = vrot.lane.b32.xlu0 %v2316, 114
        %v2364 = vpop.permute.xlu0 %2363
        %v2365 = vsel %vm993, %v2334, %v2336
        %v2366 = vsel %vm993, %v2338, %v2340
        %v2367 = vsel %vm993, %v2342, %v2344
        %v2368 = vsel %vm993, %v2346, %v2348
        %v2369 = vsel %vm993, %v2350, %v2352
        %v2370 = vsel %vm993, %v2354, %v2356
        %v2371 = vsel %vm993, %v2358, %v2360
        %v2372 = vsel %vm993, %v2362, %v2364
        %v2397 = vadd.f32 %v1808, %v2334
        %v2398 = vadd.f32 %v1809, %v2365
        %v2399 = vadd.f32 %v1810, %v2336
        %v2400 = vadd.f32 %v1811, %v2338
        %v2401 = vadd.f32 %v1812, %v2366
        %v2402 = vadd.f32 %v1813, %v2340
        %v2403 = vadd.f32 %v1814, %v2342
        %v2404 = vadd.f32 %v1815, %v2367
        %v2405 = vadd.f32 %v1816, %v2344
        %v2406 = vadd.f32 %v1817, %v2346
        %v2407 = vadd.f32 %v1818, %v2368
        %v2408 = vadd.f32 %v1819, %v2348
        %v2409 = vadd.f32 %v1820, %v2350
        %v2410 = vadd.f32 %v1821, %v2369
        %v2411 = vadd.f32 %v1822, %v2352
        %v2412 = vadd.f32 %v1823, %v2354
        %v2413 = vadd.f32 %v1824, %v2370
        %v2414 = vadd.f32 %v1825, %v2356
        %v2415 = vadd.f32 %v1826, %v2358
        %v2416 = vadd.f32 %v1827, %v2371
        %v2417 = vadd.f32 %v1828, %v2360
        %v2418 = vadd.f32 %v1829, %v2362
        %v2419 = vadd.f32 %v1830, %v2372
        %v2420 = vadd.f32 %v1831, %v2364
        %2445 = vrot.lane.b32.xlu0 %v2397, 14
        %v2446 = vpop.permute.xlu0 %2445
        %2447 = vrot.lane.b32.xlu0 %v2398, 14
        %v2448 = vpop.permute.xlu0 %2447
        %2449 = vrot.lane.b32.xlu0 %v2399, 14
        %v2450 = vpop.permute.xlu0 %2449
        %2451 = vrot.lane.b32.xlu0 %v2400, 14
        %v2452 = vpop.permute.xlu0 %2451
        %2453 = vrot.lane.b32.xlu0 %v2401, 14
        %v2454 = vpop.permute.xlu0 %2453
        %2455 = vrot.lane.b32.xlu0 %v2402, 14
        %v2456 = vpop.permute.xlu0 %2455
        %2457 = vrot.lane.b32.xlu0 %v2403, 14
        %v2458 = vpop.permute.xlu0 %2457
        %2459 = vrot.lane.b32.xlu0 %v2404, 14
        %v2460 = vpop.permute.xlu0 %2459
        %2461 = vrot.lane.b32.xlu0 %v2405, 14
        %v2462 = vpop.permute.xlu0 %2461
        %2463 = vrot.lane.b32.xlu0 %v2406, 14
        %v2464 = vpop.permute.xlu0 %2463
        %2465 = vrot.lane.b32.xlu0 %v2407, 14
        %v2466 = vpop.permute.xlu0 %2465
        %2467 = vrot.lane.b32.xlu0 %v2408, 14
        %v2468 = vpop.permute.xlu0 %2467
        %2469 = vrot.lane.b32.xlu0 %v2409, 14
        %v2470 = vpop.permute.xlu0 %2469
        %2471 = vrot.lane.b32.xlu0 %v2410, 14
        %v2472 = vpop.permute.xlu0 %2471
        %2473 = vrot.lane.b32.xlu0 %v2411, 14
        %v2474 = vpop.permute.xlu0 %2473
        %2475 = vrot.lane.b32.xlu0 %v2412, 14
        %v2476 = vpop.permute.xlu0 %2475
        %2477 = vrot.lane.b32.xlu0 %v2413, 14
        %v2478 = vpop.permute.xlu0 %2477
        %2479 = vrot.lane.b32.xlu0 %v2414, 14
        %v2480 = vpop.permute.xlu0 %2479
        %2481 = vrot.lane.b32.xlu0 %v2415, 14
        %v2482 = vpop.permute.xlu0 %2481
        %2483 = vrot.lane.b32.xlu0 %v2416, 14
        %v2484 = vpop.permute.xlu0 %2483
        %2485 = vrot.lane.b32.xlu0 %v2417, 14
        %v2486 = vpop.permute.xlu0 %2485
        %2487 = vrot.lane.b32.xlu0 %v2418, 14
        %v2488 = vpop.permute.xlu0 %2487
        %2489 = vrot.lane.b32.xlu0 %v2419, 14
        %v2490 = vpop.permute.xlu0 %2489
        %2491 = vrot.lane.b32.xlu0 %v2420, 14
        %v2492 = vpop.permute.xlu0 %2491
        %vm2493 = vcmask 113664
        %v2494 = vsel %vm2493, %v2446, %v2448
        %v2495 = vsel %vm2493, %v2448, %v2450
        %v2496 = vsel %vm2493, %v2452, %v2454
        %v2497 = vsel %vm2493, %v2454, %v2456
        %v2498 = vsel %vm2493, %v2458, %v2460
        %v2499 = vsel %vm2493, %v2460, %v2462
        %v2500 = vsel %vm2493, %v2464, %v2466
        %v2501 = vsel %vm2493, %v2466, %v2468
        %v2502 = vsel %vm2493, %v2470, %v2472
        %v2503 = vsel %vm2493, %v2472, %v2474
        %v2504 = vsel %vm2493, %v2476, %v2478
        %v2505 = vsel %vm2493, %v2478, %v2480
        %v2506 = vsel %vm2493, %v2482, %v2484
        %v2507 = vsel %vm2493, %v2484, %v2486
        %v2508 = vsel %vm2493, %v2488, %v2490
        %v2509 = vsel %vm2493, %v2490, %v2492
        %v2526 = vsel %vm563, %v2495, 0.0
        %v2527 = vadd.f32 %v2494, %v2526
        %2528 = vadd.xlane.f32.xlu0 %v2527
        %v2529 = vpop.xlane.xlu0 %2528
        %v2530 = vsel %vm563, %v2497, 0.0
        %v2531 = vadd.f32 %v2496, %v2530
        %2532 = vadd.xlane.f32.xlu0 %v2531
        %v2533 = vpop.xlane.xlu0 %2532
        %v2534 = vsel %vm563, %v2499, 0.0
        %v2535 = vadd.f32 %v2498, %v2534
        %2536 = vadd.xlane.f32.xlu0 %v2535
        %v2537 = vpop.xlane.xlu0 %2536
        %v2538 = vsel %vm563, %v2501, 0.0
        %v2539 = vadd.f32 %v2500, %v2538
        %2540 = vadd.xlane.f32.xlu0 %v2539
        %v2541 = vpop.xlane.xlu0 %2540
        %v2542 = vsel %vm563, %v2503, 0.0
        %v2543 = vadd.f32 %v2502, %v2542
        %2544 = vadd.xlane.f32.xlu0 %v2543
        %v2545 = vpop.xlane.xlu0 %2544
        %v2546 = vsel %vm563, %v2505, 0.0
        %v2547 = vadd.f32 %v2504, %v2546
        %2548 = vadd.xlane.f32.xlu0 %v2547
        %v2549 = vpop.xlane.xlu0 %2548
        %v2550 = vsel %vm563, %v2507, 0.0
        %v2551 = vadd.f32 %v2506, %v2550
        %2552 = vadd.xlane.f32.xlu0 %v2551
        %v2553 = vpop.xlane.xlu0 %2552
        %v2554 = vsel %vm563, %v2509, 0.0
        %v2555 = vadd.f32 %v2508, %v2554
        %2556 = vadd.xlane.f32.xlu0 %v2555
        %v2557 = vpop.xlane.xlu0 %2556
        %v2558 = vmul.f32 %v2529, 0.0051020407
        %v2559 = vmul.f32 %v2533, 0.0051020407
        %v2560 = vmul.f32 %v2537, 0.0051020407
        %v2561 = vmul.f32 %v2541, 0.0051020407
        %v2562 = vmul.f32 %v2545, 0.0051020407
        %v2563 = vmul.f32 %v2549, 0.0051020407
        %v2564 = vmul.f32 %v2553, 0.0051020407
        %v2565 = vmul.f32 %v2557, 0.0051020407
        %v2566 = vsub.f32 %v2397, %v2558
        %v2567 = vsub.f32 %v2398, %v2558
        %v2568 = vsub.f32 %v2399, %v2558
        %v2569 = vsub.f32 %v2400, %v2559
        %v2570 = vsub.f32 %v2401, %v2559
        %v2571 = vsub.f32 %v2402, %v2559
        %v2572 = vsub.f32 %v2403, %v2560
        %v2573 = vsub.f32 %v2404, %v2560
        %v2574 = vsub.f32 %v2405, %v2560
        %v2575 = vsub.f32 %v2406, %v2561
        %v2576 = vsub.f32 %v2407, %v2561
        %v2577 = vsub.f32 %v2408, %v2561
        %v2578 = vsub.f32 %v2409, %v2562
        %v2579 = vsub.f32 %v2410, %v2562
        %v2580 = vsub.f32 %v2411, %v2562
        %v2581 = vsub.f32 %v2412, %v2563
        %v2582 = vsub.f32 %v2413, %v2563
        %v2583 = vsub.f32 %v2414, %v2563
        %v2584 = vsub.f32 %v2415, %v2564
        %v2585 = vsub.f32 %v2416, %v2564
        %v2586 = vsub.f32 %v2417, %v2564
        %v2587 = vsub.f32 %v2418, %v2565
        %v2588 = vsub.f32 %v2419, %v2565
        %v2589 = vsub.f32 %v2420, %v2565
        %v2590 = vmul.f32 %v2566, %v2566
        %v2591 = vmul.f32 %v2567, %v2567
        %v2592 = vmul.f32 %v2568, %v2568
        %v2593 = vmul.f32 %v2569, %v2569
        %v2594 = vmul.f32 %v2570, %v2570
        %v2595 = vmul.f32 %v2571, %v2571
        %v2596 = vmul.f32 %v2572, %v2572
        %v2597 = vmul.f32 %v2573, %v2573
        %v2598 = vmul.f32 %v2574, %v2574
        %v2599 = vmul.f32 %v2575, %v2575
        %v2600 = vmul.f32 %v2576, %v2576
        %v2601 = vmul.f32 %v2577, %v2577
        %v2602 = vmul.f32 %v2578, %v2578
        %v2603 = vmul.f32 %v2579, %v2579
        %v2604 = vmul.f32 %v2580, %v2580
        %v2605 = vmul.f32 %v2581, %v2581
        %v2606 = vmul.f32 %v2582, %v2582
        %v2607 = vmul.f32 %v2583, %v2583
        %v2608 = vmul.f32 %v2584, %v2584
        %v2609 = vmul.f32 %v2585, %v2585
        %v2610 = vmul.f32 %v2586, %v2586
        %v2611 = vmul.f32 %v2587, %v2587
        %v2612 = vmul.f32 %v2588, %v2588
        %v2613 = vmul.f32 %v2589, %v2589
        %2638 = vrot.lane.b32.xlu0 %v2590, 14
        %v2639 = vpop.permute.xlu0 %2638
        %2640 = vrot.lane.b32.xlu0 %v2591, 14
        %v2641 = vpop.permute.xlu0 %2640
        %2642 = vrot.lane.b32.xlu0 %v2592, 14
        %v2643 = vpop.permute.xlu0 %2642
        %2644 = vrot.lane.b32.xlu0 %v2593, 14
        %v2645 = vpop.permute.xlu0 %2644
        %2646 = vrot.lane.b32.xlu0 %v2594, 14
        %v2647 = vpop.permute.xlu0 %2646
        %2648 = vrot.lane.b32.xlu0 %v2595, 14
        %v2649 = vpop.permute.xlu0 %2648
        %2650 = vrot.lane.b32.xlu0 %v2596, 14
        %v2651 = vpop.permute.xlu0 %2650
        %2652 = vrot.lane.b32.xlu0 %v2597, 14
        %v2653 = vpop.permute.xlu0 %2652
        %2654 = vrot.lane.b32.xlu0 %v2598, 14
        %v2655 = vpop.permute.xlu0 %2654
        %2656 = vrot.lane.b32.xlu0 %v2599, 14
        %v2657 = vpop.permute.xlu0 %2656
        %2658 = vrot.lane.b32.xlu0 %v2600, 14
        %v2659 = vpop.permute.xlu0 %2658
        %2660 = vrot.lane.b32.xlu0 %v2601, 14
        %v2661 = vpop.permute.xlu0 %2660
        %2662 = vrot.lane.b32.xlu0 %v2602, 14
        %v2663 = vpop.permute.xlu0 %2662
        %2664 = vrot.lane.b32.xlu0 %v2603, 14
        %v2665 = vpop.permute.xlu0 %2664
        %2666 = vrot.lane.b32.xlu0 %v2604, 14
        %v2667 = vpop.permute.xlu0 %2666
        %2668 = vrot.lane.b32.xlu0 %v2605, 14
        %v2669 = vpop.permute.xlu0 %2668
        %2670 = vrot.lane.b32.xlu0 %v2606, 14
        %v2671 = vpop.permute.xlu0 %2670
        %2672 = vrot.lane.b32.xlu0 %v2607, 14
        %v2673 = vpop.permute.xlu0 %2672
        %2674 = vrot.lane.b32.xlu0 %v2608, 14
        %v2675 = vpop.permute.xlu0 %2674
        %2676 = vrot.lane.b32.xlu0 %v2609, 14
        %v2677 = vpop.permute.xlu0 %2676
        %2678 = vrot.lane.b32.xlu0 %v2610, 14
        %v2679 = vpop.permute.xlu0 %2678
        %2680 = vrot.lane.b32.xlu0 %v2611, 14
        %v2681 = vpop.permute.xlu0 %2680
        %2682 = vrot.lane.b32.xlu0 %v2612, 14
        %v2683 = vpop.permute.xlu0 %2682
        %2684 = vrot.lane.b32.xlu0 %v2613, 14
        %v2685 = vpop.permute.xlu0 %2684
        %v2686 = vsel %vm2493, %v2639, %v2641
        %v2687 = vsel %vm2493, %v2641, %v2643
        %v2688 = vsel %vm2493, %v2645, %v2647
        %v2689 = vsel %vm2493, %v2647, %v2649
        %v2690 = vsel %vm2493, %v2651, %v2653
        %v2691 = vsel %vm2493, %v2653, %v2655
        %v2692 = vsel %vm2493, %v2657, %v2659
        %v2693 = vsel %vm2493, %v2659, %v2661
        %v2694 = vsel %vm2493, %v2663, %v2665
        %v2695 = vsel %vm2493, %v2665, %v2667
        %v2696 = vsel %vm2493, %v2669, %v2671
        %v2697 = vsel %vm2493, %v2671, %v2673
        %v2698 = vsel %vm2493, %v2675, %v2677
        %v2699 = vsel %vm2493, %v2677, %v2679
        %v2700 = vsel %vm2493, %v2681, %v2683
        %v2701 = vsel %vm2493, %v2683, %v2685
        %v2718 = vsel %vm563, %v2687, 0.0
        %v2719 = vadd.f32 %v2686, %v2718
        %2720 = vadd.xlane.f32.xlu0 %v2719
        %v2721 = vpop.xlane.xlu0 %2720
        %v2722 = vsel %vm563, %v2689, 0.0
        %v2723 = vadd.f32 %v2688, %v2722
        %2724 = vadd.xlane.f32.xlu0 %v2723
        %v2725 = vpop.xlane.xlu0 %2724
        %v2726 = vsel %vm563, %v2691, 0.0
        %v2727 = vadd.f32 %v2690, %v2726
        %2728 = vadd.xlane.f32.xlu0 %v2727
        %v2729 = vpop.xlane.xlu0 %2728
        %v2730 = vsel %vm563, %v2693, 0.0
        %v2731 = vadd.f32 %v2692, %v2730
        %2732 = vadd.xlane.f32.xlu0 %v2731
        %v2733 = vpop.xlane.xlu0 %2732
        %v2734 = vsel %vm563, %v2695, 0.0
        %v2735 = vadd.f32 %v2694, %v2734
        %2736 = vadd.xlane.f32.xlu0 %v2735
        %v2737 = vpop.xlane.xlu0 %2736
        %v2738 = vsel %vm563, %v2697, 0.0
        %v2739 = vadd.f32 %v2696, %v2738
        %2740 = vadd.xlane.f32.xlu0 %v2739
        %v2741 = vpop.xlane.xlu0 %2740
        %v2742 = vsel %vm563, %v2699, 0.0
        %v2743 = vadd.f32 %v2698, %v2742
        %2744 = vadd.xlane.f32.xlu0 %v2743
        %v2745 = vpop.xlane.xlu0 %2744
        %v2746 = vsel %vm563, %v2701, 0.0
        %v2747 = vadd.f32 %v2700, %v2746
        %2748 = vadd.xlane.f32.xlu0 %v2747
        %v2749 = vpop.xlane.xlu0 %2748
        %v2750 = vmul.f32 %v2721, 0.0051020407
        %v2751 = vmul.f32 %v2725, 0.0051020407
        %v2752 = vmul.f32 %v2729, 0.0051020407
        %v2753 = vmul.f32 %v2733, 0.0051020407
        %v2754 = vmul.f32 %v2737, 0.0051020407
        %v2755 = vmul.f32 %v2741, 0.0051020407
        %v2756 = vmul.f32 %v2745, 0.0051020407
        %v2757 = vmul.f32 %v2749, 0.0051020407
        %s2758 = scalar_lea.vmem %s257, %s794
        %v2759 = vld [vmem:[%s2758] sm:$0xff]
        %v2760 = vld [vmem:[%s2758 + $0x8] sm:$0xff]
        %v2761 = vld [vmem:[%s2758 + $0x10] sm:$0xff]
        %v2762 = vld [vmem:[%s2758 + $0x18] sm:$0xff]
        %v2763 = vld [vmem:[%s2758 + $0x20] sm:$0xff]
        %v2764 = vld [vmem:[%s2758 + $0x28] sm:$0xff]
        %v2765 = vld [vmem:[%s2758 + $0x30] sm:$0xff]
        %v2766 = vld [vmem:[%s2758 + $0x38] sm:$0xff]
        %v2767 = vadd.f32 %v2750, 0.001
        %v2768 = vadd.f32 %v2751, 0.001
        %v2769 = vadd.f32 %v2752, 0.001
        %v2770 = vadd.f32 %v2753, 0.001
        %v2771 = vadd.f32 %v2754, 0.001
        %v2772 = vadd.f32 %v2755, 0.001
        %v2773 = vadd.f32 %v2756, 0.001
        %v2774 = vadd.f32 %v2757, 0.001
        %v2775 = vrsqrt.pop %v2767
        %v2776 = vmul.f32 %v2775, %v2767
        %v2777 = vmul.f32 %v2776, %v2775
        %v2778 = vmul.f32 0.5, %v2777
        %v2779 = vsub.f32 1.5, %v2778
        %v2780 = vmul.f32 %v2775, %v2779
        %vm2781 = vweird.f32 %v2767
        %vm2782 = vweird.f32 %v2775
        %vm2783 = vmor %vm2781, %vm2782
        %v2784 = vsel %vm2783, %v2775, %v2780
        %v2785 = vrsqrt.pop %v2768
        %v2786 = vmul.f32 %v2785, %v2768
        %v2787 = vmul.f32 %v2786, %v2785
        %v2788 = vmul.f32 0.5, %v2787
        %v2789 = vsub.f32 1.5, %v2788
        %v2790 = vmul.f32 %v2785, %v2789
        %vm2791 = vweird.f32 %v2768
        %vm2792 = vweird.f32 %v2785
        %vm2793 = vmor %vm2791, %vm2792
        %v2794 = vsel %vm2793, %v2785, %v2790
        %v2795 = vrsqrt.pop %v2769
        %v2796 = vmul.f32 %v2795, %v2769
        %v2797 = vmul.f32 %v2796, %v2795
        %v2798 = vmul.f32 0.5, %v2797
        %v2799 = vsub.f32 1.5, %v2798
        %v2800 = vmul.f32 %v2795, %v2799
        %vm2801 = vweird.f32 %v2769
        %vm2802 = vweird.f32 %v2795
        %vm2803 = vmor %vm2801, %vm2802
        %v2804 = vsel %vm2803, %v2795, %v2800
        %v2805 = vrsqrt.pop %v2770
        %v2806 = vmul.f32 %v2805, %v2770
        %v2807 = vmul.f32 %v2806, %v2805
        %v2808 = vmul.f32 0.5, %v2807
        %v2809 = vsub.f32 1.5, %v2808
        %v2810 = vmul.f32 %v2805, %v2809
        %vm2811 = vweird.f32 %v2770
        %vm2812 = vweird.f32 %v2805
        %vm2813 = vmor %vm2811, %vm2812
        %v2814 = vsel %vm2813, %v2805, %v2810
        %v2815 = vrsqrt.pop %v2771
        %v2816 = vmul.f32 %v2815, %v2771
        %v2817 = vmul.f32 %v2816, %v2815
        %v2818 = vmul.f32 0.5, %v2817
        %v2819 = vsub.f32 1.5, %v2818
        %v2820 = vmul.f32 %v2815, %v2819
        %vm2821 = vweird.f32 %v2771
        %vm2822 = vweird.f32 %v2815
        %vm2823 = vmor %vm2821, %vm2822
        %v2824 = vsel %vm2823, %v2815, %v2820
        %v2825 = vrsqrt.pop %v2772
        %v2826 = vmul.f32 %v2825, %v2772
        %v2827 = vmul.f32 %v2826, %v2825
        %v2828 = vmul.f32 0.5, %v2827
        %v2829 = vsub.f32 1.5, %v2828
        %v2830 = vmul.f32 %v2825, %v2829
        %vm2831 = vweird.f32 %v2772
        %vm2832 = vweird.f32 %v2825
        %vm2833 = vmor %vm2831, %vm2832
        %v2834 = vsel %vm2833, %v2825, %v2830
        %v2835 = vrsqrt.pop %v2773
        %v2836 = vmul.f32 %v2835, %v2773
        %v2837 = vmul.f32 %v2836, %v2835
        %v2838 = vmul.f32 0.5, %v2837
        %v2839 = vsub.f32 1.5, %v2838
        %v2840 = vmul.f32 %v2835, %v2839
        %vm2841 = vweird.f32 %v2773
        %vm2842 = vweird.f32 %v2835
        %vm2843 = vmor %vm2841, %vm2842
        %v2844 = vsel %vm2843, %v2835, %v2840
        %v2845 = vrsqrt.pop %v2774
        %v2846 = vmul.f32 %v2845, %v2774
        %v2847 = vmul.f32 %v2846, %v2845
        %v2848 = vmul.f32 0.5, %v2847
        %v2849 = vsub.f32 1.5, %v2848
        %v2850 = vmul.f32 %v2845, %v2849
        %vm2851 = vweird.f32 %v2774
        %vm2852 = vweird.f32 %v2845
        %vm2853 = vmor %vm2851, %vm2852
        %v2854 = vsel %vm2853, %v2845, %v2850
        %v2855 = vmul.f32 %v2759, %v2784
        %v2856 = vmul.f32 %v2760, %v2794
        %v2857 = vmul.f32 %v2761, %v2804
        %v2858 = vmul.f32 %v2762, %v2814
        %v2859 = vmul.f32 %v2763, %v2824
        %v2860 = vmul.f32 %v2764, %v2834
        %v2861 = vmul.f32 %v2765, %v2844
        %v2862 = vmul.f32 %v2766, %v2854
        %2864 = vset.pattern.permute.xlu0 0
        %2865 = vperm.xlu0 %2864, %v2855
        %v2866 = vpop.permute.xlu0 %2865
        %2869 = vset.pattern.permute.xlu0 0
        %2870 = vperm.xlu0 %2869, %v2856
        %v2871 = vpop.permute.xlu0 %2870
        %2874 = vset.pattern.permute.xlu0 0
        %2875 = vperm.xlu0 %2874, %v2857
        %v2876 = vpop.permute.xlu0 %2875
        %2879 = vset.pattern.permute.xlu0 0
        %2880 = vperm.xlu0 %2879, %v2858
        %v2881 = vpop.permute.xlu0 %2880
        %2884 = vset.pattern.permute.xlu0 0
        %2885 = vperm.xlu0 %2884, %v2859
        %v2886 = vpop.permute.xlu0 %2885
        %2889 = vset.pattern.permute.xlu0 0
        %2890 = vperm.xlu0 %2889, %v2860
        %v2891 = vpop.permute.xlu0 %2890
        %2894 = vset.pattern.permute.xlu0 0
        %2895 = vperm.xlu0 %2894, %v2861
        %v2896 = vpop.permute.xlu0 %2895
        %2899 = vset.pattern.permute.xlu0 0
        %2900 = vperm.xlu0 %2899, %v2862
        %v2901 = vpop.permute.xlu0 %2900
        %v2903 = vmul.f32 %v2566, %v2866
        %v2904 = vmul.f32 %v2567, %v2866
        %v2905 = vmul.f32 %v2568, %v2866
        %v2906 = vmul.f32 %v2569, %v2871
        %v2907 = vmul.f32 %v2570, %v2871
        %v2908 = vmul.f32 %v2571, %v2871
        %v2909 = vmul.f32 %v2572, %v2876
        %v2910 = vmul.f32 %v2573, %v2876
        %v2911 = vmul.f32 %v2574, %v2876
        %v2912 = vmul.f32 %v2575, %v2881
        %v2913 = vmul.f32 %v2576, %v2881
        %v2914 = vmul.f32 %v2577, %v2881
        %v2915 = vmul.f32 %v2578, %v2886
        %v2916 = vmul.f32 %v2579, %v2886
        %v2917 = vmul.f32 %v2580, %v2886
        %v2918 = vmul.f32 %v2581, %v2891
        %v2919 = vmul.f32 %v2582, %v2891
        %v2920 = vmul.f32 %v2583, %v2891
        %v2921 = vmul.f32 %v2584, %v2896
        %v2922 = vmul.f32 %v2585, %v2896
        %v2923 = vmul.f32 %v2586, %v2896
        %v2924 = vmul.f32 %v2587, %v2901
        %v2925 = vmul.f32 %v2588, %v2901
        %v2926 = vmul.f32 %v2589, %v2901
        %s2927 = scalar_lea.vmem %s263, %s794
        %v2928 = vld [vmem:[%s2927] sm:$0xff]
        %v2929 = vld [vmem:[%s2927 + $0x8] sm:$0xff]
        %v2930 = vld [vmem:[%s2927 + $0x10] sm:$0xff]
        %v2931 = vld [vmem:[%s2927 + $0x18] sm:$0xff]
        %v2932 = vld [vmem:[%s2927 + $0x20] sm:$0xff]
        %v2933 = vld [vmem:[%s2927 + $0x28] sm:$0xff]
        %v2934 = vld [vmem:[%s2927 + $0x30] sm:$0xff]
        %v2935 = vld [vmem:[%s2927 + $0x38] sm:$0xff]
        %2937 = vset.pattern.permute.xlu0 0
        %2938 = vperm.xlu0 %2937, %v2928
        %v2939 = vpop.permute.xlu0 %2938
        %2942 = vset.pattern.permute.xlu0 0
        %2943 = vperm.xlu0 %2942, %v2929
        %v2944 = vpop.permute.xlu0 %2943
        %2947 = vset.pattern.permute.xlu0 0
        %2948 = vperm.xlu0 %2947, %v2930
        %v2949 = vpop.permute.xlu0 %2948
        %2952 = vset.pattern.permute.xlu0 0
        %2953 = vperm.xlu0 %2952, %v2931
        %v2954 = vpop.permute.xlu0 %2953
        %2957 = vset.pattern.permute.xlu0 0
        %2958 = vperm.xlu0 %2957, %v2932
        %v2959 = vpop.permute.xlu0 %2958
        %2962 = vset.pattern.permute.xlu0 0
        %2963 = vperm.xlu0 %2962, %v2933
        %v2964 = vpop.permute.xlu0 %2963
        %2967 = vset.pattern.permute.xlu0 0
        %2968 = vperm.xlu0 %2967, %v2934
        %v2969 = vpop.permute.xlu0 %2968
        %2972 = vset.pattern.permute.xlu0 0
        %2973 = vperm.xlu0 %2972, %v2935
        %v2974 = vpop.permute.xlu0 %2973
        %v2976 = vadd.f32 %v2903, %v2939
        %v2977 = vadd.f32 %v2904, %v2939
        %v2978 = vadd.f32 %v2905, %v2939
        %v2979 = vadd.f32 %v2906, %v2944
        %v2980 = vadd.f32 %v2907, %v2944
        %v2981 = vadd.f32 %v2908, %v2944
        %v2982 = vadd.f32 %v2909, %v2949
        %v2983 = vadd.f32 %v2910, %v2949
        %v2984 = vadd.f32 %v2911, %v2949
        %v2985 = vadd.f32 %v2912, %v2954
        %v2986 = vadd.f32 %v2913, %v2954
        %v2987 = vadd.f32 %v2914, %v2954
        %v2988 = vadd.f32 %v2915, %v2959
        %v2989 = vadd.f32 %v2916, %v2959
        %v2990 = vadd.f32 %v2917, %v2959
        %v2991 = vadd.f32 %v2918, %v2964
        %v2992 = vadd.f32 %v2919, %v2964
        %v2993 = vadd.f32 %v2920, %v2964
        %v2994 = vadd.f32 %v2921, %v2969
        %v2995 = vadd.f32 %v2922, %v2969
        %v2996 = vadd.f32 %v2923, %v2969
        %v2997 = vadd.f32 %v2924, %v2974
        %v2998 = vadd.f32 %v2925, %v2974
        %v2999 = vadd.f32 %v2926, %v2974
        %3024 = vrot.lane.b32.xlu0 %v2976, 14
        %v3025 = vpop.permute.xlu0 %3024
        %3026 = vrot.lane.b32.xlu0 %v2977, 14
        %v3027 = vpop.permute.xlu0 %3026
        %3028 = vrot.lane.b32.xlu0 %v2978, 14
        %v3029 = vpop.permute.xlu0 %3028
        %3030 = vrot.lane.b32.xlu0 %v2979, 14
        %v3031 = vpop.permute.xlu0 %3030
        %3032 = vrot.lane.b32.xlu0 %v2980, 14
        %v3033 = vpop.permute.xlu0 %3032
        %3034 = vrot.lane.b32.xlu0 %v2981, 14
        %v3035 = vpop.permute.xlu0 %3034
        %3036 = vrot.lane.b32.xlu0 %v2982, 14
        %v3037 = vpop.permute.xlu0 %3036
        %3038 = vrot.lane.b32.xlu0 %v2983, 14
        %v3039 = vpop.permute.xlu0 %3038
        %3040 = vrot.lane.b32.xlu0 %v2984, 14
        %v3041 = vpop.permute.xlu0 %3040
        %3042 = vrot.lane.b32.xlu0 %v2985, 14
        %v3043 = vpop.permute.xlu0 %3042
        %3044 = vrot.lane.b32.xlu0 %v2986, 14
        %v3045 = vpop.permute.xlu0 %3044
        %3046 = vrot.lane.b32.xlu0 %v2987, 14
        %v3047 = vpop.permute.xlu0 %3046
        %3048 = vrot.lane.b32.xlu0 %v2988, 14
        %v3049 = vpop.permute.xlu0 %3048
        %3050 = vrot.lane.b32.xlu0 %v2989, 14
        %v3051 = vpop.permute.xlu0 %3050
        %3052 = vrot.lane.b32.xlu0 %v2990, 14
        %v3053 = vpop.permute.xlu0 %3052
        %3054 = vrot.lane.b32.xlu0 %v2991, 14
        %v3055 = vpop.permute.xlu0 %3054
        %3056 = vrot.lane.b32.xlu0 %v2992, 14
        %v3057 = vpop.permute.xlu0 %3056
        %3058 = vrot.lane.b32.xlu0 %v2993, 14
        %v3059 = vpop.permute.xlu0 %3058
        %3060 = vrot.lane.b32.xlu0 %v2994, 14
        %v3061 = vpop.permute.xlu0 %3060
        %3062 = vrot.lane.b32.xlu0 %v2995, 14
        %v3063 = vpop.permute.xlu0 %3062
        %3064 = vrot.lane.b32.xlu0 %v2996, 14
        %v3065 = vpop.permute.xlu0 %3064
        %3066 = vrot.lane.b32.xlu0 %v2997, 14
        %v3067 = vpop.permute.xlu0 %3066
        %3068 = vrot.lane.b32.xlu0 %v2998, 14
        %v3069 = vpop.permute.xlu0 %3068
        %3070 = vrot.lane.b32.xlu0 %v2999, 14
        %v3071 = vpop.permute.xlu0 %3070
        %v3072 = vsel %vm2493, %v3025, %v3027
        %v3073 = vsel %vm2493, %v3027, %v3029
        %v3074 = vsel %vm2493, %v3031, %v3033
        %v3075 = vsel %vm2493, %v3033, %v3035
        %v3076 = vsel %vm2493, %v3037, %v3039
        %v3077 = vsel %vm2493, %v3039, %v3041
        %v3078 = vsel %vm2493, %v3043, %v3045
        %v3079 = vsel %vm2493, %v3045, %v3047
        %v3080 = vsel %vm2493, %v3049, %v3051
        %v3081 = vsel %vm2493, %v3051, %v3053
        %v3082 = vsel %vm2493, %v3055, %v3057
        %v3083 = vsel %vm2493, %v3057, %v3059
        %v3084 = vsel %vm2493, %v3061, %v3063
        %v3085 = vsel %vm2493, %v3063, %v3065
        %v3086 = vsel %vm2493, %v3067, %v3069
        %v3087 = vsel %vm2493, %v3069, %v3071
        %s3104 = smul.u32 %s795, 2
        %s3105 = smul.addr %s3104, 8
        %s3106 = scalar_lea.vmem %s270, %s3105
        %3107 = vst [vmem:[%s3106] sm:$0xff] %v3072
        %3108 = vst.msk [vmem:[%s3106 + $0x8] sm:$0xff] %vm563, %v3073
        %3109 = vst [vmem:[%s3106 + $0x10] sm:$0xff] %v3074
        %3110 = vst.msk [vmem:[%s3106 + $0x18] sm:$0xff] %vm563, %v3075
        %3111 = vst [vmem:[%s3106 + $0x20] sm:$0xff] %v3076
        %3112 = vst.msk [vmem:[%s3106 + $0x28] sm:$0xff] %vm563, %v3077
        %3113 = vst [vmem:[%s3106 + $0x30] sm:$0xff] %v3078
        %3114 = vst.msk [vmem:[%s3106 + $0x38] sm:$0xff] %vm563, %v3079
        %3115 = vst [vmem:[%s3106 + $0x40] sm:$0xff] %v3080
        %3116 = vst.msk [vmem:[%s3106 + $0x48] sm:$0xff] %vm563, %v3081
        %3117 = vst [vmem:[%s3106 + $0x50] sm:$0xff] %v3082
        %3118 = vst.msk [vmem:[%s3106 + $0x58] sm:$0xff] %vm563, %v3083
        %3119 = vst [vmem:[%s3106 + $0x60] sm:$0xff] %v3084
        %3120 = vst.msk [vmem:[%s3106 + $0x68] sm:$0xff] %vm563, %v3085
        %3121 = vst [vmem:[%s3106 + $0x70] sm:$0xff] %v3086
        %3122 = vst.msk [vmem:[%s3106 + $0x78] sm:$0xff] %vm563, %v3087
      $region41: #{dwconv_bn.1} parent=35 // loop_footer
        %s793 = sadd.s32 1, %s789
      $region42: #{dwconv_bn.1} parent=35 // loop_footer_branch
        %788 = sbr.rel target = $region38
      $region43: #{dwconv_bn.1} parent=35 // loop_exit
        _
      %s3123 = smul.u32 72, %s15
      %p3124 = scmp.lt.s32.totalorder %s3123, 143
      %s3125 = scalar_select %p3124, %s3123, 143
      %s3126 = smul.addr %s3125, 2
      %s3127 = smul.addr %s3126, 8
      %s3128 = scalar_lea.vmem %s4, %s3127
      // Predicated region
      $region44: #{dwconv_bn.1} parent=35 // pred_check
        %p3129 = pneg %p137
      $region45: #{dwconv_bn.1} parent=35 // pred_check_branch
        %3131 = sbr.rel (%p3129) target = $region47
      $region46: #{dwconv_bn.1} parent=35 // pred_region
        %s3132 = smul.u32 72, %s15
      $region47: #{dwconv_bn.1} parent=35 // pred_fallthru
        _
    $region36: #{dwconv_bn.1} parent=5 // pred_fallthru
      _
    %p3133 = scmp.le.s32.totalorder 2, %s10
    // Predicated region
    $region48: #{dwconv_bn.1} parent=5 // pred_check
      %p3134 = pneg %p3133
    $region49: #{dwconv_bn.1} parent=5 // pred_check_branch
      %3136 = sbr.rel (%p3134) target = $region51
    $region50: #{dwconv_bn.1} parent=5 // pred_region
      %s3137 = ssub.s32 %s10, 2
      // Predicated region
      $region52: #{dwconv_bn.1} parent=50 // pred_check
        %p3138 = pneg %p143
      $region53: #{dwconv_bn.1} parent=50 // pred_check_branch
        %3140 = sbr.rel (%p3138) target = $region55
      $region54: #{dwconv_bn.1} parent=50 // pred_region
        %s3141 = smul.u32 72, %s16
        %p3142 = scmp.lt.s32.totalorder %s3141, 143
        %s3143 = scalar_select %p3142, %s3141, 143
        %s3144 = smul.addr %s3143, 2
        %s3145 = smul.addr %s3144, 8
        %s3146 = scalar_lea.vmem %s4, %s3145
      $region55: #{dwconv_bn.1} parent=50 // pred_fallthru
        _
    $region51: #{dwconv_bn.1} parent=5 // pred_fallthru
      _
  $region6: #{dwconv_bn.1} parent=0 // loop_footer
    %s14 = sadd.s32 1, %s10
  $region7: #{dwconv_bn.1} parent=0 // loop_footer_branch
    %9 = sbr.rel target = $region3
  $region8: #{dwconv_bn.1} parent=0 // loop_exit
    _

</llo_original>
